<compile_context>
chip_gen: v6e
topology: v6e:2x2x1
jax: 0.10.0
libtpu: 0.0.40
codegen_flags: <defaults>
</compile_context>

<pallas_src>
import jax
import jax.numpy as jnp
from jax.experimental import pallas as pl
from jax.experimental.pallas import tpu as pltpu

LEAKY_SLOPE = 0.01  # F.leaky_relu default


def _leaky_relu(t):
    return jnp.where(t > 0, t, LEAKY_SLOPE * t)


def autoencoder_kernel(x_ref, e_ref,
                       w1r, w1s, w2r, w2s, w34r, w34s, w5r, w5s, b_ref,
                       recon_ref, xrec_ref, z_ref):
    TB, N, Cin = x_ref.shape
    C = w1r.shape[1]
    C2 = 2 * C
    M = TB * N
    f32 = jnp.float32

    x3 = x_ref[...]                      # (TB, N, Cin)  compute dtype
    e3 = e_ref[...]                      # (TB, N, N)    compute dtype
    cdt = x3.dtype

    bias = b_ref[...].astype(f32)        # (1, 5C + Cin), packed biases
    b1 = bias[:, :C]
    b2 = bias[:, C:3 * C]
    b34 = bias[:, 3 * C:5 * C]
    b5 = bias[:, 5 * C:]

    def agg(h3):
        # out[b, i, c] = sum_j edge_index[b, j, i] * h[b, j, c]
        # == edge_index.permute(0, 2, 1) @ h, with the transpose folded into
        # the contraction dimension numbers (no explicit XLU transpose).
        return jnp.einsum('bji,bjc->bic', e3, h3.astype(cdt),
                          preferred_element_type=f32)

    def dense(h_flat, a_flat, w_root, w_rel, b):
        # DenseGraphConv: (A @ h) @ W_rel + h @ W_root + b, f32 accumulation.
        return (jnp.dot(a_flat.astype(cdt), w_rel[...],
                        preferred_element_type=f32)
                + jnp.dot(h_flat.astype(cdt), w_root[...],
                          preferred_element_type=f32)
                + b)

    xf = x3.reshape(M, Cin)

    # conv1
    a1 = agg(x3).reshape(M, Cin)
    h1 = _leaky_relu(dense(xf, a1, w1s, w1r, b1))                   # (M, C)

    # conv2 -> latent z
    a2 = agg(h1.reshape(TB, N, C)).reshape(M, C)
    z = _leaky_relu(dense(h1, a2, w2s, w2r, b2))                    # (M, 2C)

    # edge_decoder_conv + x_decoder_conv2 share the aggregation of z; their
    # rel/root weights are packed so the two layers run as one wider matmul.
    az = agg(z.reshape(TB, N, C2)).reshape(M, C2)
    h34 = _leaky_relu(dense(z, az, w34s, w34r, b34))                # (M, 2C)
    re = h34[:, :C]                                                 # edge branch
    h4 = h34[:, C:]                                                 # x branch

    # recon = sigmoid(re @ re^T) per graph; transpose folded into the einsum.
    re3 = re.reshape(TB, N, C).astype(cdt)
    logits = jnp.einsum('bic,bjc->bij', re3, re3,
                        preferred_element_type=f32)
    recon_ref[...] = jax.nn.sigmoid(logits).astype(recon_ref.dtype)

    # x_decoder_conv3 (no activation)
    a5 = agg(h4.reshape(TB, N, C)).reshape(M, C)
    xo = dense(h4, a5, w5s, w5r, b5)                                # (M, Cin)

    xrec_ref[...] = xo.reshape(TB, N, Cin).astype(xrec_ref.dtype)
    z_ref[...] = z.reshape(TB, N, C2).astype(z_ref.dtype)


def autoencoder_forward(x, edge_index, params, *, tb=None,
                        compute_dtype=jnp.float32):
    """x: (B, N, Cin) f32, edge_index: (B, N, N) f32 dense adjacency.

    compute_dtype is the MXU operand dtype (accumulation is always f32).
    Use jnp.bfloat16 on v6e/v7x for MXU throughput and halved adjacency DMA.
    """
    B, N, Cin = x.shape
    C = params["w1_rel"].shape[1]
    C2 = 2 * C

    # Batch tiling: amortize per-grid-step overhead, but keep >=2 steps so a
    # v7x megacore can split the parallel batch axis across both TensorCores.
    if tb is None:
        tb = min(8, B)
        if B > 1 and B // tb < 2:
            tb = max(1, B // 2)
    n_steps = pl.cdiv(B, tb)
    B_pad = n_steps * tb
    if B_pad != B:
        pad = ((0, B_pad - B), (0, 0), (0, 0))
        x = jnp.pad(x, pad)
        edge_index = jnp.pad(edge_index, pad)

    cdt = jnp.dtype(compute_dtype)
    x_c = x.astype(cdt)
    e_c = edge_index.astype(cdt)          # 0/1 adjacency is exact in bf16

    # Pack layer-3/4 weights (they share the same aggregated z) and all biases.
    w34_rel = jnp.concatenate([params["w3_rel"], params["w4_rel"]], axis=1)
    w34_root = jnp.concatenate([params["w3_root"], params["w4_root"]], axis=1)
    weights = [params["w1_rel"], params["w1_root"],
               params["w2_rel"], params["w2_root"],
               w34_rel, w34_root,
               params["w5_rel"], params["w5_root"]]
    weights = [w.astype(cdt) for w in weights]
    bias = jnp.concatenate([params["w1_bias"], params["w2_bias"],
                            params["w3_bias"], params["w4_bias"],
                            params["w5_bias"]], axis=1).astype(jnp.float32)

    def batch_spec(trail):
        return pl.BlockSpec((tb,) + trail, lambda b: (b, 0, 0))

    def full_spec(shape):
        return pl.BlockSpec(shape, lambda b: (0,) * len(shape))

    in_specs = ([batch_spec((N, Cin)), batch_spec((N, N))]
                + [full_spec(w.shape) for w in weights]
                + [full_spec(bias.shape)])

    out_shapes = (
        jax.ShapeDtypeStruct((B_pad, N, N), jnp.float32),     # recon_edge
        jax.ShapeDtypeStruct((B_pad, N, Cin), jnp.float32),   # x reconstruction
        jax.ShapeDtypeStruct((B_pad, N, C2), jnp.float32),    # latent z
    )
    # TODO(synk): for larger channel counts, pad the last dims of x_rec / z to
    # a multiple of 128 (lane-dense unmasked stores) and slice in the wrapper.
    out_specs = (batch_spec((N, N)), batch_spec((N, Cin)), batch_spec((N, C2)))

    # Explicit VMEM budget: double-buffered I/O blocks + weights + headroom.
    io_bytes = tb * N * (N * (cdt.itemsize + 4)       # adjacency in + recon out
                         + Cin * (cdt.itemsize + 4)   # x in + x_rec out
                         + C2 * 4)                    # z out
    w_bytes = (sum(int(w.size) for w in weights) * cdt.itemsize
               + int(bias.size) * 4)
    vmem_limit = int(min(64 << 20,
                         max(32 << 20, 2 * io_bytes + 2 * w_bytes + (4 << 20))))

    fn = pl.pallas_call(
        autoencoder_kernel,
        out_shape=out_shapes,
        grid_spec=pltpu.PrefetchScalarGridSpec(
            num_scalar_prefetch=0,
            grid=(n_steps,),
            in_specs=in_specs,
            out_specs=list(out_specs),
        ),
        compiler_params=pltpu.CompilerParams(
            dimension_semantics=("parallel",),
            vmem_limit_bytes=vmem_limit),
    )
    recon, x_rec, z = fn(x_c, e_c, *weights, bias)
    if B_pad != B:
        recon, x_rec, z = recon[:B], x_rec[:B], z[:B]
    return recon, x_rec, z


def init_params(key, in_channels, conv_ch):
    """Deterministic glorot-style init for the 5 d3GraphConv layers."""
    dims = [
        (in_channels, conv_ch),        # conv1
        (conv_ch, conv_ch * 2),        # conv2
        (conv_ch * 2, conv_ch),        # edge_decoder_conv
        (conv_ch * 2, conv_ch),        # x_decoder_conv2
        (conv_ch, in_channels),        # x_decoder_conv3
    ]
    params = {}
    for i, (cin, cout) in enumerate(dims, start=1):
        key, k1, k2 = jax.random.split(key, 3)
        scale = (6.0 / (cin + cout)) ** 0.5
        params[f"w{i}_rel"] = jax.random.uniform(
            k1, (cin, cout), jnp.float32, -scale, scale)
        params[f"w{i}_root"] = jax.random.uniform(
            k2, (cin, cout), jnp.float32, -scale, scale)
        params[f"w{i}_bias"] = jnp.zeros((1, cout), jnp.float32)
    return params


def reference_forward(x, edge_index, params):
    """Plain-JAX reference of the same semantics (for verification)."""
    adj = jnp.transpose(edge_index, (0, 2, 1))

    def gconv(h, i):
        agg = jnp.einsum("bij,bjc->bic", adj, h)
        return (jnp.einsum("bic,co->bio", agg, params[f"w{i}_rel"])
                + jnp.einsum("bic,co->bio", h, params[f"w{i}_root"])
                + params[f"w{i}_bias"][None])

    lrelu = _leaky_relu
    h1 = lrelu(gconv(x, 1))
    z = lrelu(gconv(h1, 2))
    re = lrelu(gconv(z, 3))
    recon = jax.nn.sigmoid(jnp.einsum("bic,bjc->bij", re, re))
    h4 = lrelu(gconv(z, 4))
    xo = gconv(h4, 5)
    return recon, xo, z


if __name__ == "__main__":
    B, N = 2, 16
    in_channels, conv_ch = 4, 8

    key = jax.random.PRNGKey(0)
    kx, ke, kp = jax.random.split(key, 3)

    x = jax.random.normal(kx, (B, N, in_channels), jnp.float32)
    # synthetic dense adjacency (0/1, float32)
    edge_index = (jax.random.uniform(ke, (B, N, N)) > 0.5).astype(jnp.float32)

    params = init_params(kp, in_channels, conv_ch)

    # f32 compute path — verified tightly against the plain-JAX reference.
    recon_edge, x_rec, z = autoencoder_forward(x, edge_index, params)
    jax.block_until_ready((recon_edge, x_rec, z))

    r_ref, x_ref, z_ref = reference_forward(x, edge_index, params)
    assert jnp.allclose(recon_edge, r_ref, atol=1e-4, rtol=1e-4)
    assert jnp.allclose(x_rec, x_ref, atol=1e-4, rtol=1e-4)
    assert jnp.allclose(z, z_ref, atol=1e-4, rtol=1e-4)

    # bf16 MXU path (recommended on v6e/v7x): check it lowers/runs and is sane.
    rb, xb, zb = autoencoder_forward(x, edge_index, params,
                                     compute_dtype=jnp.bfloat16)
    jax.block_until_ready((rb, xb, zb))
    assert bool(jnp.all(jnp.isfinite(rb)))
    assert bool(jnp.all(jnp.isfinite(xb)))
    assert bool(jnp.all(jnp.isfinite(zb)))

    print("KERNEL_OK")
</pallas_src>

<mosaic_0001>
module attributes {stable_mosaic.version = 11 : i64} {
  func.func @autoencoder_kernel(%arg0: i32, %arg1: memref<1x16x4xf32, #tpu.memory_space<vmem>>, %arg2: memref<1x16x16xf32, #tpu.memory_space<vmem>>, %arg3: memref<4x8xf32, #tpu.memory_space<vmem>>, %arg4: memref<4x8xf32, #tpu.memory_space<vmem>>, %arg5: memref<8x16xf32, #tpu.memory_space<vmem>>, %arg6: memref<8x16xf32, #tpu.memory_space<vmem>>, %arg7: memref<16x16xf32, #tpu.memory_space<vmem>>, %arg8: memref<16x16xf32, #tpu.memory_space<vmem>>, %arg9: memref<8x4xf32, #tpu.memory_space<vmem>>, %arg10: memref<8x4xf32, #tpu.memory_space<vmem>>, %arg11: memref<1x44xf32, #tpu.memory_space<vmem>>, %arg12: memref<1x16x16xf32, #tpu.memory_space<vmem>>, %arg13: memref<1x16x4xf32, #tpu.memory_space<vmem>>, %arg14: memref<1x16x16xf32, #tpu.memory_space<vmem>>) attributes {dimension_semantics = [#tpu.dimension_semantics<parallel>], iteration_bounds = array<i64: 2>, scalar_prefetch = 0 : i64, scratch_operands = 0 : i64, tpu.core_type = #tpu.core_type<tc>, window_params = [{transform_indices = @transform_0, window_bounds = array<i64: 1, 16, 4>}, {transform_indices = @transform_1, window_bounds = array<i64: 1, 16, 16>}, {pipeline_mode = #tpu.pipeline_mode<synchronous>, transform_indices = @transform_2, window_bounds = array<i64: 4, 8>}, {pipeline_mode = #tpu.pipeline_mode<synchronous>, transform_indices = @transform_3, window_bounds = array<i64: 4, 8>}, {pipeline_mode = #tpu.pipeline_mode<synchronous>, transform_indices = @transform_4, window_bounds = array<i64: 8, 16>}, {pipeline_mode = #tpu.pipeline_mode<synchronous>, transform_indices = @transform_5, window_bounds = array<i64: 8, 16>}, {pipeline_mode = #tpu.pipeline_mode<synchronous>, transform_indices = @transform_6, window_bounds = array<i64: 16, 16>}, {pipeline_mode = #tpu.pipeline_mode<synchronous>, transform_indices = @transform_7, window_bounds = array<i64: 16, 16>}, {pipeline_mode = #tpu.pipeline_mode<synchronous>, transform_indices = @transform_8, window_bounds = array<i64: 8, 4>}, {pipeline_mode = #tpu.pipeline_mode<synchronous>, transform_indices = @transform_9, window_bounds = array<i64: 8, 4>}, {pipeline_mode = #tpu.pipeline_mode<synchronous>, transform_indices = @transform_10, window_bounds = array<i64: 1, 44>}, {transform_indices = @transform_11, window_bounds = array<i64: 1, 16, 16>}, {transform_indices = @transform_12, window_bounds = array<i64: 1, 16, 4>}, {transform_indices = @transform_13, window_bounds = array<i64: 1, 16, 16>}]} {
    %c0 = arith.constant 0 : index
    %c0_0 = arith.constant 0 : index
    %c0_1 = arith.constant 0 : index
    %0 = vector.load %arg1[%c0, %c0_0, %c0_1] : memref<1x16x4xf32, #tpu.memory_space<vmem>>, vector<1x16x4xf32>
    %c0_2 = arith.constant 0 : index
    %c0_3 = arith.constant 0 : index
    %c0_4 = arith.constant 0 : index
    %1 = vector.load %arg2[%c0_2, %c0_3, %c0_4] : memref<1x16x16xf32, #tpu.memory_space<vmem>>, vector<1x16x16xf32>
    %c0_5 = arith.constant 0 : index
    %c0_6 = arith.constant 0 : index
    %2 = vector.load %arg11[%c0_5, %c0_6] : memref<1x44xf32, #tpu.memory_space<vmem>>, vector<1x44xf32>
    %3 = vector.extract_strided_slice %2 {offsets = [0, 0], sizes = [1, 8], strides = [1, 1]} : vector<1x44xf32> to vector<1x8xf32>
    %4 = vector.extract_strided_slice %2 {offsets = [0, 8], sizes = [1, 16], strides = [1, 1]} : vector<1x44xf32> to vector<1x16xf32>
    %5 = vector.extract_strided_slice %2 {offsets = [0, 24], sizes = [1, 16], strides = [1, 1]} : vector<1x44xf32> to vector<1x16xf32>
    %6 = vector.extract_strided_slice %2 {offsets = [0, 40], sizes = [1, 4], strides = [1, 1]} : vector<1x44xf32> to vector<1x4xf32>
    %7 = vector.shape_cast %0 : vector<1x16x4xf32> to vector<16x4xf32>
    "tpu.trace_start"() <{level = 10 : i32, message = "bji,bjc->bic"}> : () -> ()
    %cst = arith.constant dense<0.000000e+00> : vector<1x16x4xf32>
    %8 = tpu.matmul %1, %0, %cst {dimension_numbers = #tpu.dot_dimension_numbers<[1], [1], [2], [2], [0, 0, 0, 2, 1, 2], [0], [0]>} : vector<1x16x16xf32>, vector<1x16x4xf32>, vector<1x16x4xf32> -> vector<1x16x4xf32>
    "tpu.trace_stop"() : () -> ()
    %9 = vector.shape_cast %8 : vector<1x16x4xf32> to vector<16x4xf32>
    %c0_7 = arith.constant 0 : index
    %c0_8 = arith.constant 0 : index
    %10 = vector.load %arg3[%c0_7, %c0_8] : memref<4x8xf32, #tpu.memory_space<vmem>>, vector<4x8xf32>
    %cst_9 = arith.constant dense<0.000000e+00> : vector<16x8xf32>
    %11 = tpu.matmul %9, %10, %cst_9 {dimension_numbers = #tpu.dot_dimension_numbers<[1], [0], [0], [1], [0, 0, 1, 1], [], []>} : vector<16x4xf32>, vector<4x8xf32>, vector<16x8xf32> -> vector<16x8xf32>
    %c0_10 = arith.constant 0 : index
    %c0_11 = arith.constant 0 : index
    %12 = vector.load %arg4[%c0_10, %c0_11] : memref<4x8xf32, #tpu.memory_space<vmem>>, vector<4x8xf32>
    %cst_12 = arith.constant dense<0.000000e+00> : vector<16x8xf32>
    %13 = tpu.matmul %7, %12, %cst_12 {dimension_numbers = #tpu.dot_dimension_numbers<[1], [0], [0], [1], [0, 0, 1, 1], [], []>} : vector<16x4xf32>, vector<4x8xf32>, vector<16x8xf32> -> vector<16x8xf32>
    %14 = arith.addf %11, %13 : vector<16x8xf32>
    %15 = vector.broadcast %3 : vector<1x8xf32> to vector<16x8xf32>
    %16 = arith.addf %14, %15 : vector<16x8xf32>
    %cst_13 = arith.constant 0.000000e+00 : f32
    %17 = vector.broadcast %cst_13 : f32 to vector<16x8xf32>
    %18 = arith.cmpf ogt, %16, %17 : vector<16x8xf32>
    %cst_14 = arith.constant 0.00999999977 : f32
    %19 = vector.broadcast %cst_14 : f32 to vector<16x8xf32>
    %20 = arith.mulf %19, %16 : vector<16x8xf32>
    %21 = arith.select %18, %16, %20 : vector<16x8xi1>, vector<16x8xf32>
    %22 = vector.shape_cast %21 : vector<16x8xf32> to vector<1x16x8xf32>
    "tpu.trace_start"() <{level = 10 : i32, message = "bji,bjc->bic"}> : () -> ()
    %cst_15 = arith.constant dense<0.000000e+00> : vector<1x16x8xf32>
    %23 = tpu.matmul %1, %22, %cst_15 {dimension_numbers = #tpu.dot_dimension_numbers<[1], [1], [2], [2], [0, 0, 0, 2, 1, 2], [0], [0]>} : vector<1x16x16xf32>, vector<1x16x8xf32>, vector<1x16x8xf32> -> vector<1x16x8xf32>
    "tpu.trace_stop"() : () -> ()
    %24 = vector.shape_cast %23 : vector<1x16x8xf32> to vector<16x8xf32>
    %c0_16 = arith.constant 0 : index
    %c0_17 = arith.constant 0 : index
    %25 = vector.load %arg5[%c0_16, %c0_17] : memref<8x16xf32, #tpu.memory_space<vmem>>, vector<8x16xf32>
    %cst_18 = arith.constant dense<0.000000e+00> : vector<16x16xf32>
    %26 = tpu.matmul %24, %25, %cst_18 {dimension_numbers = #tpu.dot_dimension_numbers<[1], [0], [0], [1], [0, 0, 1, 1], [], []>} : vector<16x8xf32>, vector<8x16xf32>, vector<16x16xf32> -> vector<16x16xf32>
    %c0_19 = arith.constant 0 : index
    %c0_20 = arith.constant 0 : index
    %27 = vector.load %arg6[%c0_19, %c0_20] : memref<8x16xf32, #tpu.memory_space<vmem>>, vector<8x16xf32>
    %cst_21 = arith.constant dense<0.000000e+00> : vector<16x16xf32>
    %28 = tpu.matmul %21, %27, %cst_21 {dimension_numbers = #tpu.dot_dimension_numbers<[1], [0], [0], [1], [0, 0, 1, 1], [], []>} : vector<16x8xf32>, vector<8x16xf32>, vector<16x16xf32> -> vector<16x16xf32>
    %29 = arith.addf %26, %28 : vector<16x16xf32>
    %30 = vector.broadcast %4 : vector<1x16xf32> to vector<16x16xf32>
    %31 = arith.addf %29, %30 : vector<16x16xf32>
    %cst_22 = arith.constant 0.000000e+00 : f32
    %32 = vector.broadcast %cst_22 : f32 to vector<16x16xf32>
    %33 = arith.cmpf ogt, %31, %32 : vector<16x16xf32>
    %cst_23 = arith.constant 0.00999999977 : f32
    %34 = vector.broadcast %cst_23 : f32 to vector<16x16xf32>
    %35 = arith.mulf %34, %31 : vector<16x16xf32>
    %36 = arith.select %33, %31, %35 : vector<16x16xi1>, vector<16x16xf32>
    %37 = vector.shape_cast %36 : vector<16x16xf32> to vector<1x16x16xf32>
    "tpu.trace_start"() <{level = 10 : i32, message = "bji,bjc->bic"}> : () -> ()
    %cst_24 = arith.constant dense<0.000000e+00> : vector<1x16x16xf32>
    %38 = tpu.matmul %1, %37, %cst_24 {dimension_numbers = #tpu.dot_dimension_numbers<[1], [1], [2], [2], [0, 0, 0, 2, 1, 2], [0], [0]>} : vector<1x16x16xf32>, vector<1x16x16xf32>, vector<1x16x16xf32> -> vector<1x16x16xf32>
    "tpu.trace_stop"() : () -> ()
    %39 = vector.shape_cast %38 : vector<1x16x16xf32> to vector<16x16xf32>
    %c0_25 = arith.constant 0 : index
    %c0_26 = arith.constant 0 : index
    %40 = vector.load %arg7[%c0_25, %c0_26] : memref<16x16xf32, #tpu.memory_space<vmem>>, vector<16x16xf32>
    %cst_27 = arith.constant dense<0.000000e+00> : vector<16x16xf32>
    %41 = tpu.matmul %39, %40, %cst_27 {dimension_numbers = #tpu.dot_dimension_numbers<[1], [0], [0], [1], [0, 0, 1, 1], [], []>} : vector<16x16xf32>, vector<16x16xf32>, vector<16x16xf32> -> vector<16x16xf32>
    %c0_28 = arith.constant 0 : index
    %c0_29 = arith.constant 0 : index
    %42 = vector.load %arg8[%c0_28, %c0_29] : memref<16x16xf32, #tpu.memory_space<vmem>>, vector<16x16xf32>
    %cst_30 = arith.constant dense<0.000000e+00> : vector<16x16xf32>
    %43 = tpu.matmul %36, %42, %cst_30 {dimension_numbers = #tpu.dot_dimension_numbers<[1], [0], [0], [1], [0, 0, 1, 1], [], []>} : vector<16x16xf32>, vector<16x16xf32>, vector<16x16xf32> -> vector<16x16xf32>
    %44 = arith.addf %41, %43 : vector<16x16xf32>
    %45 = vector.broadcast %5 : vector<1x16xf32> to vector<16x16xf32>
    %46 = arith.addf %44, %45 : vector<16x16xf32>
    %cst_31 = arith.constant 0.000000e+00 : f32
    %47 = vector.broadcast %cst_31 : f32 to vector<16x16xf32>
    %48 = arith.cmpf ogt, %46, %47 : vector<16x16xf32>
    %cst_32 = arith.constant 0.00999999977 : f32
    %49 = vector.broadcast %cst_32 : f32 to vector<16x16xf32>
    %50 = arith.mulf %49, %46 : vector<16x16xf32>
    %51 = arith.select %48, %46, %50 : vector<16x16xi1>, vector<16x16xf32>
    %52 = vector.extract_strided_slice %51 {offsets = [0, 0], sizes = [16, 8], strides = [1, 1]} : vector<16x16xf32> to vector<16x8xf32>
    %53 = vector.extract_strided_slice %51 {offsets = [0, 8], sizes = [16, 8], strides = [1, 1]} : vector<16x16xf32> to vector<16x8xf32>
    %54 = vector.shape_cast %52 : vector<16x8xf32> to vector<1x16x8xf32>
    "tpu.trace_start"() <{level = 10 : i32, message = "bic,bjc->bij"}> : () -> ()
    %cst_33 = arith.constant dense<0.000000e+00> : vector<1x16x16xf32>
    %55 = tpu.matmul %54, %54, %cst_33 {dimension_numbers = #tpu.dot_dimension_numbers<[2], [2], [1], [1], [0, 0, 0, 1, 1, 1], [0], [0]>} : vector<1x16x8xf32>, vector<1x16x8xf32>, vector<1x16x16xf32> -> vector<1x16x16xf32>
    "tpu.trace_stop"() : () -> ()
    %56 = arith.negf %55 : vector<1x16x16xf32>
    %57 = math.exp %56 : vector<1x16x16xf32>
    %cst_34 = arith.constant 1.000000e+00 : f32
    %58 = vector.broadcast %cst_34 : f32 to vector<1x16x16xf32>
    %59 = arith.addf %58, %57 : vector<1x16x16xf32>
    %60 = arith.divf %58, %59 : vector<1x16x16xf32>
    %c0_35 = arith.constant 0 : index
    %c0_36 = arith.constant 0 : index
    %c0_37 = arith.constant 0 : index
    %61 = vector.load %arg12[%c0_35, %c0_36, %c0_37] : memref<1x16x16xf32, #tpu.memory_space<vmem>>, vector<1x16x16xf32>
    tpu.vector_store %arg12[%c0_35, %c0_36, %c0_37], %60 {strides = array<i32>} : memref<1x16x16xf32, #tpu.memory_space<vmem>>, vector<1x16x16xf32>,
    %62 = vector.shape_cast %53 : vector<16x8xf32> to vector<1x16x8xf32>
    "tpu.trace_start"() <{level = 10 : i32, message = "bji,bjc->bic"}> : () -> ()
    %cst_38 = arith.constant dense<0.000000e+00> : vector<1x16x8xf32>
    %63 = tpu.matmul %1, %62, %cst_38 {dimension_numbers = #tpu.dot_dimension_numbers<[1], [1], [2], [2], [0, 0, 0, 2, 1, 2], [0], [0]>} : vector<1x16x16xf32>, vector<1x16x8xf32>, vector<1x16x8xf32> -> vector<1x16x8xf32>
    "tpu.trace_stop"() : () -> ()
    %64 = vector.shape_cast %63 : vector<1x16x8xf32> to vector<16x8xf32>
    %c0_39 = arith.constant 0 : index
    %c0_40 = arith.constant 0 : index
    %65 = vector.load %arg9[%c0_39, %c0_40] : memref<8x4xf32, #tpu.memory_space<vmem>>, vector<8x4xf32>
    %cst_41 = arith.constant dense<0.000000e+00> : vector<16x4xf32>
    %66 = tpu.matmul %64, %65, %cst_41 {dimension_numbers = #tpu.dot_dimension_numbers<[1], [0], [0], [1], [0, 0, 1, 1], [], []>} : vector<16x8xf32>, vector<8x4xf32>, vector<16x4xf32> -> vector<16x4xf32>
    %c0_42 = arith.constant 0 : index
    %c0_43 = arith.constant 0 : index
    %67 = vector.load %arg10[%c0_42, %c0_43] : memref<8x4xf32, #tpu.memory_space<vmem>>, vector<8x4xf32>
    %cst_44 = arith.constant dense<0.000000e+00> : vector<16x4xf32>
    %68 = tpu.matmul %53, %67, %cst_44 {dimension_numbers = #tpu.dot_dimension_numbers<[1], [0], [0], [1], [0, 0, 1, 1], [], []>} : vector<16x8xf32>, vector<8x4xf32>, vector<16x4xf32> -> vector<16x4xf32>
    %69 = arith.addf %66, %68 : vector<16x4xf32>
    %70 = vector.broadcast %6 : vector<1x4xf32> to vector<16x4xf32>
    %71 = arith.addf %69, %70 : vector<16x4xf32>
    %72 = vector.shape_cast %71 : vector<16x4xf32> to vector<1x16x4xf32>
    %c0_45 = arith.constant 0 : index
    %c0_46 = arith.constant 0 : index
    %c0_47 = arith.constant 0 : index
    %73 = vector.load %arg13[%c0_45, %c0_46, %c0_47] : memref<1x16x4xf32, #tpu.memory_space<vmem>>, vector<1x16x4xf32>
    tpu.vector_store %arg13[%c0_45, %c0_46, %c0_47], %72 {strides = array<i32>} : memref<1x16x4xf32, #tpu.memory_space<vmem>>, vector<1x16x4xf32>,
    %74 = vector.shape_cast %36 : vector<16x16xf32> to vector<1x16x16xf32>
    %c0_48 = arith.constant 0 : index
    %c0_49 = arith.constant 0 : index
    %c0_50 = arith.constant 0 : index
    %75 = vector.load %arg14[%c0_48, %c0_49, %c0_50] : memref<1x16x16xf32, #tpu.memory_space<vmem>>, vector<1x16x16xf32>
    tpu.vector_store %arg14[%c0_48, %c0_49, %c0_50], %74 {strides = array<i32>} : memref<1x16x16xf32, #tpu.memory_space<vmem>>, vector<1x16x16xf32>,
    return
  }
  func.func @transform_0(%arg0: i32) -> (i32, i32, i32) {
    %c0_i32 = arith.constant 0 : i32
    %c0_i32_0 = arith.constant 0 : i32
    %c0_i32_1 = arith.constant 0 : i32
    return %arg0, %c0_i32, %c0_i32_0 : i32, i32, i32
  }
  func.func @transform_1(%arg0: i32) -> (i32, i32, i32) {
    %c0_i32 = arith.constant 0 : i32
    %c0_i32_0 = arith.constant 0 : i32
    %c0_i32_1 = arith.constant 0 : i32
    return %arg0, %c0_i32, %c0_i32_0 : i32, i32, i32
  }
  func.func @transform_2(%arg0: i32) -> (i32, i32) {
    %c0_i32 = arith.constant 0 : i32
    %c0_i32_0 = arith.constant 0 : i32
    %c0_i32_1 = arith.constant 0 : i32
    return %c0_i32, %c0_i32_0 : i32, i32
  }
  func.func @transform_3(%arg0: i32) -> (i32, i32) {
    %c0_i32 = arith.constant 0 : i32
    %c0_i32_0 = arith.constant 0 : i32
    %c0_i32_1 = arith.constant 0 : i32
    return %c0_i32, %c0_i32_0 : i32, i32
  }
  func.func @transform_4(%arg0: i32) -> (i32, i32) {
    %c0_i32 = arith.constant 0 : i32
    %c0_i32_0 = arith.constant 0 : i32
    %c0_i32_1 = arith.constant 0 : i32
    return %c0_i32, %c0_i32_0 : i32, i32
  }
  func.func @transform_5(%arg0: i32) -> (i32, i32) {
    %c0_i32 = arith.constant 0 : i32
    %c0_i32_0 = arith.constant 0 : i32
    %c0_i32_1 = arith.constant 0 : i32
    return %c0_i32, %c0_i32_0 : i32, i32
  }
  func.func @transform_6(%arg0: i32) -> (i32, i32) {
    %c0_i32 = arith.constant 0 : i32
    %c0_i32_0 = arith.constant 0 : i32
    %c0_i32_1 = arith.constant 0 : i32
    return %c0_i32, %c0_i32_0 : i32, i32
  }
  func.func @transform_7(%arg0: i32) -> (i32, i32) {
    %c0_i32 = arith.constant 0 : i32
    %c0_i32_0 = arith.constant 0 : i32
    %c0_i32_1 = arith.constant 0 : i32
    return %c0_i32, %c0_i32_0 : i32, i32
  }
  func.func @transform_8(%arg0: i32) -> (i32, i32) {
    %c0_i32 = arith.constant 0 : i32
    %c0_i32_0 = arith.constant 0 : i32
    %c0_i32_1 = arith.constant 0 : i32
    return %c0_i32, %c0_i32_0 : i32, i32
  }
  func.func @transform_9(%arg0: i32) -> (i32, i32) {
    %c0_i32 = arith.constant 0 : i32
    %c0_i32_0 = arith.constant 0 : i32
    %c0_i32_1 = arith.constant 0 : i32
    return %c0_i32, %c0_i32_0 : i32, i32
  }
  func.func @transform_10(%arg0: i32) -> (i32, i32) {
    %c0_i32 = arith.constant 0 : i32
    %c0_i32_0 = arith.constant 0 : i32
    %c0_i32_1 = arith.constant 0 : i32
    return %c0_i32, %c0_i32_0 : i32, i32
  }
  func.func @transform_11(%arg0: i32) -> (i32, i32, i32) {
    %c0_i32 = arith.constant 0 : i32
    %c0_i32_0 = arith.constant 0 : i32
    %c0_i32_1 = arith.constant 0 : i32
    return %arg0, %c0_i32, %c0_i32_0 : i32, i32, i32
  }
  func.func @transform_12(%arg0: i32) -> (i32, i32, i32) {
    %c0_i32 = arith.constant 0 : i32
    %c0_i32_0 = arith.constant 0 : i32
    %c0_i32_1 = arith.constant 0 : i32
    return %arg0, %c0_i32, %c0_i32_0 : i32, i32, i32
  }
  func.func @transform_13(%arg0: i32) -> (i32, i32, i32) {
    %c0_i32 = arith.constant 0 : i32
    %c0_i32_0 = arith.constant 0 : i32
    %c0_i32_1 = arith.constant 0 : i32
    return %arg0, %c0_i32, %c0_i32_0 : i32, i32, i32
  }
}

</mosaic_0001>

<llo_original>
// kernel: tpu_custom_call.1
$region0: #{tpu_custom_call.1}
  #allocation0 [shape = 'u32[]', space=smem, size = 0x4, offset = 0x4, fixed_abs, tag = 'smem constant byte address 0x4 - core index']
  #allocation1 [shape = 'u32[144,128]{1,0:T(1,128)}', space=vmem, size = 0x12000, scoped, tag = 'internal scratch']
  %s0 = inlined_call_operand.vmem [shape: f32[2,16,4], index: 0, kind: input, shape index: {}]
  %s1 = inlined_call_operand.vmem [shape: f32[2,16,16], index: 1, kind: input, shape index: {}]
  %s2 = inlined_call_operand.hbm [shape: f32[4,8], index: 2, kind: input, shape index: {}]
  %s3 = inlined_call_operand.hbm [shape: f32[4,8], index: 3, kind: input, shape index: {}]
  %s4 = inlined_call_operand.hbm [shape: f32[8,16], index: 4, kind: input, shape index: {}]
  %s5 = inlined_call_operand.vmem [shape: f32[8,16], index: 5, kind: input, shape index: {}]
  %s6 = inlined_call_operand.vmem [shape: f32[16,16], index: 6, kind: input, shape index: {}]
  %s7 = inlined_call_operand.vmem [shape: f32[16,16], index: 7, kind: input, shape index: {}]
  %s8 = inlined_call_operand.vmem [shape: f32[8,4], index: 8, kind: input, shape index: {}]
  %s9 = inlined_call_operand.vmem [shape: f32[8,4], index: 9, kind: input, shape index: {}]
  %s10 = inlined_call_operand.vmem [shape: f32[1,44], index: 10, kind: input, shape index: {}]
  %s11 = inlined_call_operand.hbm [shape: f32[2,16,16], index: 11, kind: output, shape index: {0}]
  %s12 = inlined_call_operand.vmem [shape: f32[2,16,4], index: 12, kind: output, shape index: {1}]
  %s13 = inlined_call_operand.hbm [shape: f32[2,16,16], index: 13, kind: output, shape index: {2}]
  %14 = xla_tuple %s11, %s12, %s13
  %s15 = sld [smem:[#allocation0]]
  $region105: #{tpu_custom_call.1} parent=0
    _
  %s17 = ssub.s32 1, %s15
  %s18 = scalar_select 0, %s17, %s15
  $region1: #{tpu_custom_call.1} parent=0
    #allocation2 [shape = 'u8[2048]{0}', space=vmem, size = 0x800, scoped, tag = 'input window, operand 2, single buffered']
    #allocation3 [shape = 's32[2]{0}', space=sflag, size = 0x8, scoped, tag = 'scoped memory for tpu_custom_call.1']
    #allocation4 [shape = 's32[2]{0}', space=sflag, size = 0x8, scoped, tag = 'scoped memory for tpu_custom_call.1']
    #allocation5 [shape = 'u8[2048]{0}', space=vmem, size = 0x800, scoped, tag = 'input window, operand 3, single buffered']
    #allocation6 [shape = 's32[1]{0}', space=sflag, size = 0x4, scoped, tag = 'scoped memory for tpu_custom_call.1']
    #allocation7 [shape = 'u8[4096]{0}', space=vmem, size = 0x1000, scoped, tag = 'input window, operand 4, single buffered']
    #allocation8 [shape = 'u8[16384]{0}', space=vmem, size = 0x4000, scoped, tag = 'output window, operand 0']
    #allocation9 [shape = 'u8[16384]{0}', space=vmem, size = 0x4000, scoped, tag = 'output window, operand 2']
    #allocation10 [shape = 's32[2]{0}', space=sflag, size = 0x8, scoped, tag = 'scoped memory for tpu_custom_call.1']
    %19 = vsyncpa [#allocation3], 0
    %20 = vsyncpa [#allocation6], 0
    %21 = vsyncpa [#allocation4], 0
    %s22 = scalar_lea.sflag [#allocation4], 1
    %23 = vsyncpa %s22, 0
    %24 = vsyncpa [#allocation10], 0
    %s25 = scalar_lea.sflag [#allocation10], 1
    %26 = vsyncpa %s25, 0
    loop: start=0, step=1, limit=4
    $region2: #{tpu_custom_call.1} parent=1 // loop_pre_header
      _
    $region3: #{tpu_custom_call.1} parent=1 // loop_header
      %s28 = sphi 0, %s32
      %p29 = scmp.ge.s32.totalorder %s28, 4
      %s38 = sphi 0, %s40
      %s41 = sphi 0, %s38
      %s42 = sphi 0, %s41
      %s58 = sphi 0, %s42
      %s64 = sphi 0, %s66
      %s67 = sphi 0, %s64
      %s68 = sphi 0, %s67
      %s84 = sphi 0, %s68
      %s88 = sphi 0, %s88
      %s90 = sphi 0, %s88
      %s91 = sphi 0, %s90
      %s105 = sphi 0, %s91
      %s109 = sphi 0, %s109
      %s111 = sphi 0, %s109
      %s112 = sphi 0, %s111
      %s126 = sphi 0, %s112
      %s130 = sphi 0, %s130
      %s132 = sphi 0, %s130
      %s133 = sphi 0, %s132
      %s147 = sphi 0, %s133
      %s151 = sphi 0, %s151
      %s153 = sphi 0, %s151
      %s154 = sphi 0, %s153
      %s168 = sphi 0, %s154
      %s172 = sphi 0, %s172
      %s174 = sphi 0, %s172
      %s175 = sphi 0, %s174
      %s189 = sphi 0, %s175
      %s193 = sphi 0, %s193
      %s195 = sphi 0, %s193
      %s196 = sphi 0, %s195
      %s210 = sphi 0, %s196
      %s214 = sphi 0, %s214
      %s216 = sphi 0, %s214
      %s217 = sphi 0, %s216
      %s231 = sphi 0, %s217
      %s235 = sphi 0, %s235
      %s237 = sphi 0, %s235
      %s238 = sphi 0, %s237
      %s252 = sphi 0, %s238
      %s256 = sphi 0, %s256
      %s258 = sphi 0, %s256
      %s259 = sphi 0, %s258
      %s273 = sphi 0, %s259
      %s279 = sphi 0, %s281
      %s282 = sphi 0, %s279
      %s283 = sphi 0, %s282
      %s299 = sphi 0, %s283
      %s305 = sphi 0, %s307
      %s308 = sphi 0, %s305
      %s309 = sphi 0, %s308
      %s325 = sphi 0, %s309
      %s331 = sphi 0, %s333
      %s334 = sphi 0, %s331
      %s335 = sphi 0, %s334
      %s351 = sphi 0, %s335
    $region4: #{tpu_custom_call.1} parent=1 // loop_header_branch
      %31 = sbr.rel (%p29) target = $region8
    $region5: #{tpu_custom_call.1} parent=1 // loop_body
      %s33 = ssub.s32 %s28, 1
      %s34 = ssub.s32 %s28, 2
      %s35 = sadd.s32 %s28, 1
      %s36 = ssub.s32 %s28, %s35
      %p37 = scmp.eq.s32.totalorder %s36, 0
      %s39 = sadd.s32 %s38, 1
      %s40 = scalar_select %p37, %s38, %s39
      %p43 = pneg %p37
      %p44 = scmp.eq.s32.totalorder %s28, 1
      %p45 = por %p43, %p44
      %p46 = scmp.ne.s32.totalorder %s38, %s41
      %p47 = scmp.eq.s32.totalorder %s28, 0
      %p48 = por %p46, %p47
      %p49 = scmp.ne.s32.totalorder %s38, %s41
      %p50 = scmp.eq.s32.totalorder %s33, 1
      %p51 = por %p49, %p50
      %p52 = scmp.ne.s32.totalorder %s41, %s42
      %p53 = scmp.eq.s32.totalorder %s33, 0
      %p54 = por %p52, %p53
      %p55 = scmp.ne.s32.totalorder %s41, %s42
      %p56 = scmp.eq.s32.totalorder %s34, 1
      %p57 = por %p55, %p56
      %p59 = scmp.ne.s32.totalorder %s42, %s58
      %p60 = scmp.eq.s32.totalorder %s34, 0
      %p61 = por %p59, %p60
      %s62 = ssub.s32 %s28, %s35
      %p63 = scmp.eq.s32.totalorder %s62, 0
      %s65 = sadd.s32 %s64, 1
      %s66 = scalar_select %p63, %s64, %s65
      %p69 = pneg %p63
      %p70 = scmp.eq.s32.totalorder %s28, 1
      %p71 = por %p69, %p70
      %p72 = scmp.ne.s32.totalorder %s64, %s67
      %p73 = scmp.eq.s32.totalorder %s28, 0
      %p74 = por %p72, %p73
      %p75 = scmp.ne.s32.totalorder %s64, %s67
      %p76 = scmp.eq.s32.totalorder %s33, 1
      %p77 = por %p75, %p76
      %p78 = scmp.ne.s32.totalorder %s67, %s68
      %p79 = scmp.eq.s32.totalorder %s33, 0
      %p80 = por %p78, %p79
      %p81 = scmp.ne.s32.totalorder %s67, %s68
      %p82 = scmp.eq.s32.totalorder %s34, 1
      %p83 = por %p81, %p82
      %p85 = scmp.ne.s32.totalorder %s68, %s84
      %p86 = scmp.eq.s32.totalorder %s34, 0
      %p87 = por %p85, %p86
      %s89 = sadd.s32 %s88, 1
      %p92 = scmp.eq.s32.totalorder %s28, 1
      %p93 = scmp.ne.s32.totalorder %s88, %s90
      %p94 = scmp.eq.s32.totalorder %s28, 0
      %p95 = por %p93, %p94
      %p96 = scmp.ne.s32.totalorder %s88, %s90
      %p97 = scmp.eq.s32.totalorder %s33, 1
      %p98 = por %p96, %p97
      %p99 = scmp.ne.s32.totalorder %s90, %s91
      %p100 = scmp.eq.s32.totalorder %s33, 0
      %p101 = por %p99, %p100
      %p102 = scmp.ne.s32.totalorder %s90, %s91
      %p103 = scmp.eq.s32.totalorder %s34, 1
      %p104 = por %p102, %p103
      %p106 = scmp.ne.s32.totalorder %s91, %s105
      %p107 = scmp.eq.s32.totalorder %s34, 0
      %p108 = por %p106, %p107
      %s110 = sadd.s32 %s109, 1
      %p113 = scmp.eq.s32.totalorder %s28, 1
      %p114 = scmp.ne.s32.totalorder %s109, %s111
      %p115 = scmp.eq.s32.totalorder %s28, 0
      %p116 = por %p114, %p115
      %p117 = scmp.ne.s32.totalorder %s109, %s111
      %p118 = scmp.eq.s32.totalorder %s33, 1
      %p119 = por %p117, %p118
      %p120 = scmp.ne.s32.totalorder %s111, %s112
      %p121 = scmp.eq.s32.totalorder %s33, 0
      %p122 = por %p120, %p121
      %p123 = scmp.ne.s32.totalorder %s111, %s112
      %p124 = scmp.eq.s32.totalorder %s34, 1
      %p125 = por %p123, %p124
      %p127 = scmp.ne.s32.totalorder %s112, %s126
      %p128 = scmp.eq.s32.totalorder %s34, 0
      %p129 = por %p127, %p128
      %s131 = sadd.s32 %s130, 1
      %p134 = scmp.eq.s32.totalorder %s28, 1
      %p135 = scmp.ne.s32.totalorder %s130, %s132
      %p136 = scmp.eq.s32.totalorder %s28, 0
      %p137 = por %p135, %p136
      %p138 = scmp.ne.s32.totalorder %s130, %s132
      %p139 = scmp.eq.s32.totalorder %s33, 1
      %p140 = por %p138, %p139
      %p141 = scmp.ne.s32.totalorder %s132, %s133
      %p142 = scmp.eq.s32.totalorder %s33, 0
      %p143 = por %p141, %p142
      %p144 = scmp.ne.s32.totalorder %s132, %s133
      %p145 = scmp.eq.s32.totalorder %s34, 1
      %p146 = por %p144, %p145
      %p148 = scmp.ne.s32.totalorder %s133, %s147
      %p149 = scmp.eq.s32.totalorder %s34, 0
      %p150 = por %p148, %p149
      %s152 = sadd.s32 %s151, 1
      %p155 = scmp.eq.s32.totalorder %s28, 1
      %p156 = scmp.ne.s32.totalorder %s151, %s153
      %p157 = scmp.eq.s32.totalorder %s28, 0
      %p158 = por %p156, %p157
      %p159 = scmp.ne.s32.totalorder %s151, %s153
      %p160 = scmp.eq.s32.totalorder %s33, 1
      %p161 = por %p159, %p160
      %p162 = scmp.ne.s32.totalorder %s153, %s154
      %p163 = scmp.eq.s32.totalorder %s33, 0
      %p164 = por %p162, %p163
      %p165 = scmp.ne.s32.totalorder %s153, %s154
      %p166 = scmp.eq.s32.totalorder %s34, 1
      %p167 = por %p165, %p166
      %p169 = scmp.ne.s32.totalorder %s154, %s168
      %p170 = scmp.eq.s32.totalorder %s34, 0
      %p171 = por %p169, %p170
      %s173 = sadd.s32 %s172, 1
      %p176 = scmp.eq.s32.totalorder %s28, 1
      %p177 = scmp.ne.s32.totalorder %s172, %s174
      %p178 = scmp.eq.s32.totalorder %s28, 0
      %p179 = por %p177, %p178
      %p180 = scmp.ne.s32.totalorder %s172, %s174
      %p181 = scmp.eq.s32.totalorder %s33, 1
      %p182 = por %p180, %p181
      %p183 = scmp.ne.s32.totalorder %s174, %s175
      %p184 = scmp.eq.s32.totalorder %s33, 0
      %p185 = por %p183, %p184
      %p186 = scmp.ne.s32.totalorder %s174, %s175
      %p187 = scmp.eq.s32.totalorder %s34, 1
      %p188 = por %p186, %p187
      %p190 = scmp.ne.s32.totalorder %s175, %s189
      %p191 = scmp.eq.s32.totalorder %s34, 0
      %p192 = por %p190, %p191
      %s194 = sadd.s32 %s193, 1
      %p197 = scmp.eq.s32.totalorder %s28, 1
      %p198 = scmp.ne.s32.totalorder %s193, %s195
      %p199 = scmp.eq.s32.totalorder %s28, 0
      %p200 = por %p198, %p199
      %p201 = scmp.ne.s32.totalorder %s193, %s195
      %p202 = scmp.eq.s32.totalorder %s33, 1
      %p203 = por %p201, %p202
      %p204 = scmp.ne.s32.totalorder %s195, %s196
      %p205 = scmp.eq.s32.totalorder %s33, 0
      %p206 = por %p204, %p205
      %p207 = scmp.ne.s32.totalorder %s195, %s196
      %p208 = scmp.eq.s32.totalorder %s34, 1
      %p209 = por %p207, %p208
      %p211 = scmp.ne.s32.totalorder %s196, %s210
      %p212 = scmp.eq.s32.totalorder %s34, 0
      %p213 = por %p211, %p212
      %s215 = sadd.s32 %s214, 1
      %p218 = scmp.eq.s32.totalorder %s28, 1
      %p219 = scmp.ne.s32.totalorder %s214, %s216
      %p220 = scmp.eq.s32.totalorder %s28, 0
      %p221 = por %p219, %p220
      %p222 = scmp.ne.s32.totalorder %s214, %s216
      %p223 = scmp.eq.s32.totalorder %s33, 1
      %p224 = por %p222, %p223
      %p225 = scmp.ne.s32.totalorder %s216, %s217
      %p226 = scmp.eq.s32.totalorder %s33, 0
      %p227 = por %p225, %p226
      %p228 = scmp.ne.s32.totalorder %s216, %s217
      %p229 = scmp.eq.s32.totalorder %s34, 1
      %p230 = por %p228, %p229
      %p232 = scmp.ne.s32.totalorder %s217, %s231
      %p233 = scmp.eq.s32.totalorder %s34, 0
      %p234 = por %p232, %p233
      %s236 = sadd.s32 %s235, 1
      %p239 = scmp.eq.s32.totalorder %s28, 1
      %p240 = scmp.ne.s32.totalorder %s235, %s237
      %p241 = scmp.eq.s32.totalorder %s28, 0
      %p242 = por %p240, %p241
      %p243 = scmp.ne.s32.totalorder %s235, %s237
      %p244 = scmp.eq.s32.totalorder %s33, 1
      %p245 = por %p243, %p244
      %p246 = scmp.ne.s32.totalorder %s237, %s238
      %p247 = scmp.eq.s32.totalorder %s33, 0
      %p248 = por %p246, %p247
      %p249 = scmp.ne.s32.totalorder %s237, %s238
      %p250 = scmp.eq.s32.totalorder %s34, 1
      %p251 = por %p249, %p250
      %p253 = scmp.ne.s32.totalorder %s238, %s252
      %p254 = scmp.eq.s32.totalorder %s34, 0
      %p255 = por %p253, %p254
      %s257 = sadd.s32 %s256, 1
      %p260 = scmp.eq.s32.totalorder %s28, 1
      %p261 = scmp.ne.s32.totalorder %s256, %s258
      %p262 = scmp.eq.s32.totalorder %s28, 0
      %p263 = por %p261, %p262
      %p264 = scmp.ne.s32.totalorder %s256, %s258
      %p265 = scmp.eq.s32.totalorder %s33, 1
      %p266 = por %p264, %p265
      %p267 = scmp.ne.s32.totalorder %s258, %s259
      %p268 = scmp.eq.s32.totalorder %s33, 0
      %p269 = por %p267, %p268
      %p270 = scmp.ne.s32.totalorder %s258, %s259
      %p271 = scmp.eq.s32.totalorder %s34, 1
      %p272 = por %p270, %p271
      %p274 = scmp.ne.s32.totalorder %s259, %s273
      %p275 = scmp.eq.s32.totalorder %s34, 0
      %p276 = por %p274, %p275
      %s277 = ssub.s32 %s28, %s35
      %p278 = scmp.eq.s32.totalorder %s277, 0
      %s280 = sadd.s32 %s279, 1
      %s281 = scalar_select %p278, %s279, %s280
      %p284 = pneg %p278
      %p285 = scmp.eq.s32.totalorder %s28, 1
      %p286 = por %p284, %p285
      %p287 = scmp.ne.s32.totalorder %s279, %s282
      %p288 = scmp.eq.s32.totalorder %s28, 0
      %p289 = por %p287, %p288
      %p290 = scmp.ne.s32.totalorder %s279, %s282
      %p291 = scmp.eq.s32.totalorder %s33, 1
      %p292 = por %p290, %p291
      %p293 = scmp.ne.s32.totalorder %s282, %s283
      %p294 = scmp.eq.s32.totalorder %s33, 0
      %p295 = por %p293, %p294
      %p296 = scmp.ne.s32.totalorder %s282, %s283
      %p297 = scmp.eq.s32.totalorder %s34, 1
      %p298 = por %p296, %p297
      %p300 = scmp.ne.s32.totalorder %s283, %s299
      %p301 = scmp.eq.s32.totalorder %s34, 0
      %p302 = por %p300, %p301
      %s303 = ssub.s32 %s28, %s35
      %p304 = scmp.eq.s32.totalorder %s303, 0
      %s306 = sadd.s32 %s305, 1
      %s307 = scalar_select %p304, %s305, %s306
      %p310 = pneg %p304
      %p311 = scmp.eq.s32.totalorder %s28, 1
      %p312 = por %p310, %p311
      %p313 = scmp.ne.s32.totalorder %s305, %s308
      %p314 = scmp.eq.s32.totalorder %s28, 0
      %p315 = por %p313, %p314
      %p316 = scmp.ne.s32.totalorder %s305, %s308
      %p317 = scmp.eq.s32.totalorder %s33, 1
      %p318 = por %p316, %p317
      %p319 = scmp.ne.s32.totalorder %s308, %s309
      %p320 = scmp.eq.s32.totalorder %s33, 0
      %p321 = por %p319, %p320
      %p322 = scmp.ne.s32.totalorder %s308, %s309
      %p323 = scmp.eq.s32.totalorder %s34, 1
      %p324 = por %p322, %p323
      %p326 = scmp.ne.s32.totalorder %s309, %s325
      %p327 = scmp.eq.s32.totalorder %s34, 0
      %p328 = por %p326, %p327
      %s329 = ssub.s32 %s28, %s35
      %p330 = scmp.eq.s32.totalorder %s329, 0
      %s332 = sadd.s32 %s331, 1
      %s333 = scalar_select %p330, %s331, %s332
      %p336 = pneg %p330
      %p337 = scmp.eq.s32.totalorder %s28, 1
      %p338 = por %p336, %p337
      %p339 = scmp.ne.s32.totalorder %s331, %s334
      %p340 = scmp.eq.s32.totalorder %s28, 0
      %p341 = por %p339, %p340
      %p342 = scmp.ne.s32.totalorder %s331, %s334
      %p343 = scmp.eq.s32.totalorder %s33, 1
      %p344 = por %p342, %p343
      %p345 = scmp.ne.s32.totalorder %s334, %s335
      %p346 = scmp.eq.s32.totalorder %s33, 0
      %p347 = por %p345, %p346
      %p348 = scmp.ne.s32.totalorder %s334, %s335
      %p349 = scmp.eq.s32.totalorder %s34, 1
      %p350 = por %p348, %p349
      %p352 = scmp.ne.s32.totalorder %s335, %s351
      %p353 = scmp.eq.s32.totalorder %s34, 0
      %p354 = por %p352, %p353
      %p355 = scmp.le.s32.totalorder 1, %s28
      %p356 = scmp.lt.s32.totalorder %s28, 3
      %p357 = pnand %p355, %p356
      %p358 = pneg %p357
      // Predicated region
      $region9: #{tpu_custom_call.1} parent=5 // pred_check
        _
      $region10: #{tpu_custom_call.1} parent=5 // pred_check_branch
        %360 = sbr.rel (%p357) target = $region12
      $region11: #{tpu_custom_call.1} parent=5 // pred_region
        %s361 = ssub.s32 %s28, 1
        // Predicated region
        $region13: #{tpu_custom_call.1} parent=11 // pred_check
          %p362 = pneg %p101
        $region14: #{tpu_custom_call.1} parent=11 // pred_check_branch
          %364 = sbr.rel (%p362) target = $region16
        $region15: #{tpu_custom_call.1} parent=11 // pred_region
          %s366 = ssub.s32 64, 64
          %367 = vsyncadd [#allocation3], %s366
          %s369 = sshll.u32 [#allocation2], 4
          %s370 = int_to_ptr.vmem [resolvable:$true] %s369
          %372 = dma.hbm_to_vmem [thread:$0]  %s2, 64, %s370, [#allocation3]
        $region16: #{tpu_custom_call.1} parent=11 // pred_fallthru
          _
        // Predicated region
        $region17: #{tpu_custom_call.1} parent=11 // pred_check
          %p373 = pneg %p122
        $region18: #{tpu_custom_call.1} parent=11 // pred_check_branch
          %375 = sbr.rel (%p373) target = $region20
        $region19: #{tpu_custom_call.1} parent=11 // pred_region
          %s377 = ssub.s32 64, 64
          %378 = vsyncadd [#allocation6], %s377
          %s380 = sshll.u32 [#allocation5], 4
          %s381 = int_to_ptr.vmem [resolvable:$true] %s380
          %383 = dma.hbm_to_vmem [thread:$0]  %s3, 64, %s381, [#allocation6]
        $region20: #{tpu_custom_call.1} parent=11 // pred_fallthru
          _
        // Predicated region
        $region21: #{tpu_custom_call.1} parent=11 // pred_check
          %p384 = pneg %p143
        $region22: #{tpu_custom_call.1} parent=11 // pred_check_branch
          %386 = sbr.rel (%p384) target = $region24
        $region23: #{tpu_custom_call.1} parent=11 // pred_region
          %s388 = ssub.s32 128, 128
          %389 = vsyncadd [#allocation6], %s388
          %s391 = sshll.u32 [#allocation7], 4
          %s392 = int_to_ptr.vmem [resolvable:$true] %s391
          %394 = dma.hbm_to_vmem [thread:$0]  %s4, 128, %s392, [#allocation6]
        $region24: #{tpu_custom_call.1} parent=11 // pred_fallthru
          _
        // Predicated region
        $region25: #{tpu_custom_call.1} parent=11 // pred_check
          %p395 = pneg %p164
        $region26: #{tpu_custom_call.1} parent=11 // pred_check_branch
          %397 = sbr.rel (%p395) target = $region28
        $region27: #{tpu_custom_call.1} parent=11 // pred_region
          _
        $region28: #{tpu_custom_call.1} parent=11 // pred_fallthru
          _
        // Predicated region
        $region29: #{tpu_custom_call.1} parent=11 // pred_check
          %p398 = pneg %p185
        $region30: #{tpu_custom_call.1} parent=11 // pred_check_branch
          %400 = sbr.rel (%p398) target = $region32
        $region31: #{tpu_custom_call.1} parent=11 // pred_region
          _
        $region32: #{tpu_custom_call.1} parent=11 // pred_fallthru
          _
        // Predicated region
        $region33: #{tpu_custom_call.1} parent=11 // pred_check
          %p401 = pneg %p206
        $region34: #{tpu_custom_call.1} parent=11 // pred_check_branch
          %403 = sbr.rel (%p401) target = $region36
        $region35: #{tpu_custom_call.1} parent=11 // pred_region
          _
        $region36: #{tpu_custom_call.1} parent=11 // pred_fallthru
          _
        // Predicated region
        $region37: #{tpu_custom_call.1} parent=11 // pred_check
          %p404 = pneg %p227
        $region38: #{tpu_custom_call.1} parent=11 // pred_check_branch
          %406 = sbr.rel (%p404) target = $region40
        $region39: #{tpu_custom_call.1} parent=11 // pred_region
          _
        $region40: #{tpu_custom_call.1} parent=11 // pred_fallthru
          _
        // Predicated region
        $region41: #{tpu_custom_call.1} parent=11 // pred_check
          %p407 = pneg %p248
        $region42: #{tpu_custom_call.1} parent=11 // pred_check_branch
          %409 = sbr.rel (%p407) target = $region44
        $region43: #{tpu_custom_call.1} parent=11 // pred_region
          _
        $region44: #{tpu_custom_call.1} parent=11 // pred_fallthru
          _
        // Predicated region
        $region45: #{tpu_custom_call.1} parent=11 // pred_check
          %p410 = pneg %p269
        $region46: #{tpu_custom_call.1} parent=11 // pred_check_branch
          %412 = sbr.rel (%p410) target = $region48
        $region47: #{tpu_custom_call.1} parent=11 // pred_region
          _
        $region48: #{tpu_custom_call.1} parent=11 // pred_fallthru
          _
      $region12: #{tpu_custom_call.1} parent=5 // pred_fallthru
        _
      %p413 = scmp.lt.s32.totalorder %s28, 2
      // Predicated region
      $region49: #{tpu_custom_call.1} parent=5 // pred_check
        %p414 = pneg %p413
      $region50: #{tpu_custom_call.1} parent=5 // pred_check_branch
        %416 = sbr.rel (%p414) target = $region52
      $region51: #{tpu_custom_call.1} parent=5 // pred_region
        // Predicated region
        $region53: #{tpu_custom_call.1} parent=51 // pred_check
          %p417 = pneg %p48
        $region54: #{tpu_custom_call.1} parent=51 // pred_check_branch
          %419 = sbr.rel (%p417) target = $region56
        $region55: #{tpu_custom_call.1} parent=51 // pred_region
          %p420 = scmp.lt.s32.totalorder %s28, 1
          %s421 = scalar_select %p420, %s28, 1
          %s422 = smul.addr %s421, 2
          %s423 = smul.addr %s422, 8
          %s424 = scalar_lea.vmem %s0, %s423
        $region56: #{tpu_custom_call.1} parent=51 // pred_fallthru
          _
        // Predicated region
        $region57: #{tpu_custom_call.1} parent=51 // pred_check
          %p425 = pneg %p74
        $region58: #{tpu_custom_call.1} parent=51 // pred_check_branch
          %427 = sbr.rel (%p425) target = $region60
        $region59: #{tpu_custom_call.1} parent=51 // pred_region
          %p428 = scmp.lt.s32.totalorder %s28, 1
          %s429 = scalar_select %p428, %s28, 1
          %s430 = smul.addr %s429, 2
          %s431 = smul.addr %s430, 8
          %s432 = scalar_lea.vmem %s1, %s431
        $region60: #{tpu_custom_call.1} parent=51 // pred_fallthru
          _
      $region52: #{tpu_custom_call.1} parent=5 // pred_fallthru
        _
      %p433 = scmp.le.s32.totalorder 1, %s28
      %p434 = scmp.lt.s32.totalorder %s28, 3
      %p435 = pnand %p433, %p434
      %p436 = pneg %p435
      // Predicated region
      $region61: #{tpu_custom_call.1} parent=5 // pred_check
        _
      $region62: #{tpu_custom_call.1} parent=5 // pred_check_branch
        %438 = sbr.rel (%p435) target = $region64
      $region63: #{tpu_custom_call.1} parent=5 // pred_region
        %s439 = ssub.s32 %s28, 1
        // Predicated region
        $region65: #{tpu_custom_call.1} parent=63 // pred_check
          %p440 = pneg %p101
        $region66: #{tpu_custom_call.1} parent=63 // pred_check_branch
          %442 = sbr.rel (%p440) target = $region68
        $region67: #{tpu_custom_call.1} parent=63 // pred_region
          %443 = dma.done [#allocation3], 64
        $region68: #{tpu_custom_call.1} parent=63 // pred_fallthru
          _
        // Predicated region
        $region69: #{tpu_custom_call.1} parent=63 // pred_check
          %p444 = pneg %p122
        $region70: #{tpu_custom_call.1} parent=63 // pred_check_branch
          %446 = sbr.rel (%p444) target = $region72
        $region71: #{tpu_custom_call.1} parent=63 // pred_region
          %447 = dma.done [#allocation6], 64
        $region72: #{tpu_custom_call.1} parent=63 // pred_fallthru
          _
        // Predicated region
        $region73: #{tpu_custom_call.1} parent=63 // pred_check
          %p448 = pneg %p143
        $region74: #{tpu_custom_call.1} parent=63 // pred_check_branch
          %450 = sbr.rel (%p448) target = $region76
        $region75: #{tpu_custom_call.1} parent=63 // pred_region
          %451 = dma.done [#allocation6], 128
        $region76: #{tpu_custom_call.1} parent=63 // pred_fallthru
          _
        %p452 = scmp.lt.s32.totalorder %s33, 1
        %s453 = scalar_select %p452, %s33, 1
        %s454 = smul.addr %s453, 2
        %s455 = smul.addr %s454, 8
        %s456 = scalar_lea.vmem %s0, %s455
        %p457 = pneg %p54
        %p458 = pneg %p51
        %p459 = scmp.lt.s32.totalorder %s33, 1
        %s460 = scalar_select %p459, %s33, 1
        %s461 = smul.addr %s460, 2
        %s462 = smul.addr %s461, 8
        %s463 = scalar_lea.vmem %s1, %s462
        %p464 = pneg %p80
        %p465 = pneg %p77
        %p466 = pneg %p101
        %p467 = pneg %p98
        %p468 = pneg %p122
        %p469 = pneg %p119
        %p470 = pneg %p143
        %p471 = pneg %p140
        %p472 = pneg %p164
        %p473 = pneg %p161
        %p474 = pneg %p185
        %p475 = pneg %p182
        %p476 = pneg %p206
        %p477 = pneg %p203
        %p478 = pneg %p227
        %p479 = pneg %p224
        %p480 = pneg %p248
        %p481 = pneg %p245
        %p482 = pneg %p269
        %p483 = pneg %p266
        %p484 = pneg %p295
        %p485 = pneg %p292
        %s486 = sand.u32 %s282, 1
        %s487 = scalar_lea.sflag [#allocation4], %s486
        %s488 = sand.u32 %s282, 1
        %s489 = smul.addr %s488, 16
        %s490 = scalar_lea.vmem [#allocation8], %s489
        %p491 = pneg %p321
        %p492 = pneg %p318
        %p493 = scmp.lt.s32.totalorder %s33, 1
        %s494 = scalar_select %p493, %s33, 1
        %s495 = smul.addr %s494, 2
        %s496 = smul.addr %s495, 8
        %s497 = scalar_lea.vmem %s12, %s496
        %p498 = pneg %p347
        %p499 = pneg %p344
        %s500 = sand.u32 %s334, 1
        %s501 = scalar_lea.sflag [#allocation10], %s500
        %s502 = sand.u32 %s334, 1
        %s503 = smul.addr %s502, 16
        %s504 = scalar_lea.vmem [#allocation9], %s503
        %p505 = scmp.lt.s32.totalorder %s33, 1
        %s506 = scalar_select %p505, %s33, 1
        %s507 = smul.addr %s506, 2
        %s508 = smul.addr %s507, 8
        %s509 = scalar_lea.vmem %s0, %s508
        %p510 = scmp.lt.s32.totalorder %s33, 1
        %s511 = scalar_select %p510, %s33, 1
        %s512 = smul.addr %s511, 2
        %s513 = smul.addr %s512, 8
        %s514 = scalar_lea.vmem %s1, %s513
        %p515 = scmp.lt.s32.totalorder %s33, 1
        %s516 = scalar_select %p515, %s33, 1
        %s517 = smul.addr %s516, 2
        %s518 = smul.addr %s517, 8
        %s519 = scalar_lea.vmem %s12, %s518
        %v520 = vld [vmem:[%s509] sm:$0xff]
        %v521 = vld [vmem:[%s509 + $0x8] sm:$0xff]
        %v522 = vld [vmem:[%s514] sm:$0xff]
        %v523 = vld [vmem:[%s514 + $0x8] sm:$0xff]
        %v524 = vld [vmem:[%s10] sm:$0x1]
        %525 = vxpose.xlu0.b32.start [1/16] %v522, 128
        %526 = vxpose.xlu0.b32.cont [2/16] %v523, 128
        %527 = vxpose.xlu0.b32.cont [3/16] 0.0, 128
        %528 = vxpose.xlu0.b32.cont [4/16] 0.0, 128
        %529 = vxpose.xlu0.b32.cont [5/16] 0.0, 128
        %530 = vxpose.xlu0.b32.cont [6/16] 0.0, 128
        %531 = vxpose.xlu0.b32.cont [7/16] 0.0, 128
        %532 = vxpose.xlu0.b32.cont [8/16] 0.0, 128
        %533 = vxpose.xlu0.b32.cont [9/16] 0.0, 128
        %534 = vxpose.xlu0.b32.cont [10/16] 0.0, 128
        %535 = vxpose.xlu0.b32.cont [11/16] 0.0, 128
        %536 = vxpose.xlu0.b32.cont [12/16] 0.0, 128
        %537 = vxpose.xlu0.b32.cont [13/16] 0.0, 128
        %538 = vxpose.xlu0.b32.cont [14/16] 0.0, 128
        %539 = vxpose.xlu0.b32.cont [15/16] 0.0, 128
        %540 = vxpose.xlu0.b32.end [16/16] 0.0, 128
        %v541 = vpop.trf.xlu0
        %v542 = vpop.trf.xlu0
        %v543 = vpop.trf.xlu0
        %v544 = vpop.trf.xlu0
        %v545 = vpop.trf.xlu0
        %v546 = vpop.trf.xlu0
        %v547 = vpop.trf.xlu0
        %v548 = vpop.trf.xlu0
        %v549 = vpop.trf.xlu0
        %v550 = vpop.trf.xlu0
        %v551 = vpop.trf.xlu0
        %v552 = vpop.trf.xlu0
        %v553 = vpop.trf.xlu0
        %v554 = vpop.trf.xlu0
        %v555 = vpop.trf.xlu0
        %v556 = vpop.trf.xlu0
        %vm557 = vcmask 130048
        %v559 = vsel %vm557, %v541, 0
        %v562 = vsel %vm557, %v542, 0
        %564 = vmatprep.subr.mxu0 0.0
        %565 = vmatpush1.msra.mxu0 0.0
        %566 = vmatprep.subr.mxu0 0.0
        %567 = vmatpush1.msra.mxu0 0.0
        %568 = vmatprep.subr.mxu0 0.0
        %569 = vmatpush1.msra.mxu0 0.0
        %570 = vmatprep.subr.mxu0 0.0
        %571 = vmatpush1.msra.mxu0 0.0
        %572 = vmatprep.subr.mxu0 0.0
        %573 = vmatpush1.msra.mxu0 0.0
        %574 = vmatprep.subr.mxu0 0.0
        %575 = vmatpush1.msra.mxu0 0.0
        %576 = vmatprep.subr.mxu0 0.0
        %577 = vmatpush1.msra.mxu0 0.0
        %578 = vmatprep.subr.mxu0 0.0
        %579 = vmatpush1.msra.mxu0 0.0
        %580 = vmatprep.subr.mxu0 0.0
        %581 = vmatpush1.msra.mxu0 0.0
        %582 = vmatprep.subr.mxu0 0.0
        %583 = vmatpush1.msra.mxu0 0.0
        %584 = vmatprep.subr.mxu0 0.0
        %585 = vmatpush1.msra.mxu0 0.0
        %586 = vmatprep.subr.mxu0 0.0
        %587 = vmatpush1.msra.mxu0 0.0
        %588 = vmatprep.subr.mxu0 0.0
        %589 = vmatpush1.msra.mxu0 0.0
        %590 = vmatprep.subr.mxu0 0.0
        %591 = vmatpush1.msra.mxu0 0.0
        %592 = vmatprep.subr.mxu0 0.0
        %593 = vmatpush1.msra.mxu0 %v521
        %594 = vmatprep.subr.mxu0 0.0
        %595 = vmatpush1.msra.mxu0 %v520
        %596 = vmatprep.subr.mxu0 0.0
        %597 = vmatpush2.msra.mxu0 0.0
        %598 = vmatprep.subr.mxu0 0.0
        %599 = vmatpush2.msra.mxu0 0.0
        %600 = vmatprep.subr.mxu0 0.0
        %601 = vmatpush2.msra.mxu0 0.0
        %602 = vmatprep.subr.mxu0 0.0
        %603 = vmatpush2.msra.mxu0 0.0
        %604 = vmatprep.subr.mxu0 0.0
        %605 = vmatpush2.msra.mxu0 0.0
        %606 = vmatprep.subr.mxu0 0.0
        %607 = vmatpush2.msra.mxu0 0.0
        %608 = vmatprep.subr.mxu0 0.0
        %609 = vmatpush2.msra.mxu0 0.0
        %610 = vmatprep.subr.mxu0 0.0
        %611 = vmatpush2.msra.mxu0 0.0
        %612 = vmatprep.subr.mxu0 0.0
        %613 = vmatpush2.msra.mxu0 0.0
        %614 = vmatprep.subr.mxu0 0.0
        %615 = vmatpush2.msra.mxu0 0.0
        %616 = vmatprep.subr.mxu0 0.0
        %617 = vmatpush2.msra.mxu0 0.0
        %618 = vmatprep.subr.mxu0 0.0
        %619 = vmatpush2.msra.mxu0 0.0
        %620 = vmatprep.subr.mxu0 0.0
        %621 = vmatpush2.msra.mxu0 0.0
        %622 = vmatprep.subr.mxu0 0.0
        %623 = vmatpush2.msra.mxu0 0.0
        %624 = vmatprep.subr.mxu0 0.0
        %625 = vmatpush2.msra.mxu0 0.0
        %626 = vmatprep.subr.mxu0 0.0
        %627 = vmatpush2.msra.mxu0 0.0
        %628 = vmatprep.mubr.f32.mxu0 0.0
        %629 = vmatmul.mubr.f32.gmra.mxu0 %v559
        %v630 = vpop.f32.mrf.mxu0
        %v631 = vadd.f32 0.0, %v630
        %v632 = vpop.f32.mrf.mxu0
        %633 = vmatprep.mubr.f32.mxu0 0.0
        %634 = vmatmul.mubr.f32.gmra.mxu0 %v562
        %v635 = vpop.f32.mrf.mxu0
        %v636 = vadd.f32 0.0, %v635
        %v637 = vpop.f32.mrf.mxu0
        %638 = vdwg.mxu0
        %v639 = vld [vmem:[#allocation2] sm:$0xf]
        %v640 = vld [vmem:[#allocation5] sm:$0xf]
        %vm641 = vcmask 31744
        %v643 = vsel %vm641, %v520, 0
        %v646 = vsel %vm641, %v521, 0
        %vm648 = vcmask 1043456
        %v650 = vsel %vm648, %v640, 0
        %652 = vmatprep.subr.mxu0 0.0
        %653 = vmatpush1.msra.mxu0 0.0
        %654 = vmatprep.subr.mxu0 0.0
        %655 = vmatpush1.msra.mxu0 0.0
        %656 = vmatprep.subr.mxu0 0.0
        %657 = vmatpush1.msra.mxu0 0.0
        %658 = vmatprep.subr.mxu0 0.0
        %659 = vmatpush1.msra.mxu0 0.0
        %660 = vmatprep.subr.mxu0 0.0
        %661 = vmatpush1.msra.mxu0 0.0
        %662 = vmatprep.subr.mxu0 0.0
        %663 = vmatpush1.msra.mxu0 0.0
        %664 = vmatprep.subr.mxu0 0.0
        %665 = vmatpush1.msra.mxu0 0.0
        %666 = vmatprep.subr.mxu0 0.0
        %667 = vmatpush1.msra.mxu0 0.0
        %668 = vmatprep.subr.mxu0 0.0
        %669 = vmatpush1.msra.mxu0 0.0
        %670 = vmatprep.subr.mxu0 0.0
        %671 = vmatpush1.msra.mxu0 0.0
        %672 = vmatprep.subr.mxu0 0.0
        %673 = vmatpush1.msra.mxu0 0.0
        %674 = vmatprep.subr.mxu0 0.0
        %675 = vmatpush1.msra.mxu0 0.0
        %676 = vmatprep.subr.mxu0 0.0
        %677 = vmatpush1.msra.mxu0 0.0
        %678 = vmatprep.subr.mxu0 0.0
        %679 = vmatpush1.msra.mxu0 0.0
        %680 = vmatprep.subr.mxu0 0.0
        %681 = vmatpush1.msra.mxu0 0.0
        %682 = vmatprep.subr.mxu0 0.0
        %683 = vmatpush1.msra.mxu0 %v650
        %684 = vmatprep.subr.mxu0 0.0
        %685 = vmatpush2.msra.mxu0 0.0
        %686 = vmatprep.subr.mxu0 0.0
        %687 = vmatpush2.msra.mxu0 0.0
        %688 = vmatprep.subr.mxu0 0.0
        %689 = vmatpush2.msra.mxu0 0.0
        %690 = vmatprep.subr.mxu0 0.0
        %691 = vmatpush2.msra.mxu0 0.0
        %692 = vmatprep.subr.mxu0 0.0
        %693 = vmatpush2.msra.mxu0 0.0
        %694 = vmatprep.subr.mxu0 0.0
        %695 = vmatpush2.msra.mxu0 0.0
        %696 = vmatprep.subr.mxu0 0.0
        %697 = vmatpush2.msra.mxu0 0.0
        %698 = vmatprep.subr.mxu0 0.0
        %699 = vmatpush2.msra.mxu0 0.0
        %700 = vmatprep.subr.mxu0 0.0
        %701 = vmatpush2.msra.mxu0 0.0
        %702 = vmatprep.subr.mxu0 0.0
        %703 = vmatpush2.msra.mxu0 0.0
        %704 = vmatprep.subr.mxu0 0.0
        %705 = vmatpush2.msra.mxu0 0.0
        %706 = vmatprep.subr.mxu0 0.0
        %707 = vmatpush2.msra.mxu0 0.0
        %708 = vmatprep.subr.mxu0 0.0
        %709 = vmatpush2.msra.mxu0 0.0
        %710 = vmatprep.subr.mxu0 0.0
        %711 = vmatpush2.msra.mxu0 0.0
        %712 = vmatprep.subr.mxu0 0.0
        %713 = vmatpush2.msra.mxu0 0.0
        %714 = vmatprep.subr.mxu0 0.0
        %715 = vmatpush2.msra.mxu0 0.0
        %716 = vmatprep.mubr.f32.mxu0 0.0
        %717 = vmatmul.mubr.f32.gmra.mxu0 %v643
        %v718 = vpop.f32.mrf.mxu0
        %v719 = vadd.f32 0.0, %v718
        %v720 = vpop.f32.mrf.mxu0
        %721 = vmatprep.mubr.f32.mxu0 0.0
        %722 = vmatmul.mubr.f32.gmra.mxu0 %v646
        %v723 = vpop.f32.mrf.mxu0
        %v724 = vadd.f32 0.0, %v723
        %v725 = vpop.f32.mrf.mxu0
        %726 = vdwg.mxu0
        %v728 = vsel %vm641, %v631, 0
        %v731 = vsel %vm641, %v636, 0
        %v734 = vsel %vm648, %v639, 0
        %736 = vmatprep.subr.mxu0 0.0
        %737 = vmatpush1.msra.mxu0 0.0
        %738 = vmatprep.subr.mxu0 0.0
        %739 = vmatpush1.msra.mxu0 0.0
        %740 = vmatprep.subr.mxu0 0.0
        %741 = vmatpush1.msra.mxu0 0.0
        %742 = vmatprep.subr.mxu0 0.0
        %743 = vmatpush1.msra.mxu0 0.0
        %744 = vmatprep.subr.mxu0 0.0
        %745 = vmatpush1.msra.mxu0 0.0
        %746 = vmatprep.subr.mxu0 0.0
        %747 = vmatpush1.msra.mxu0 0.0
        %748 = vmatprep.subr.mxu0 0.0
        %749 = vmatpush1.msra.mxu0 0.0
        %750 = vmatprep.subr.mxu0 0.0
        %751 = vmatpush1.msra.mxu0 0.0
        %752 = vmatprep.subr.mxu0 0.0
        %753 = vmatpush1.msra.mxu0 0.0
        %754 = vmatprep.subr.mxu0 0.0
        %755 = vmatpush1.msra.mxu0 0.0
        %756 = vmatprep.subr.mxu0 0.0
        %757 = vmatpush1.msra.mxu0 0.0
        %758 = vmatprep.subr.mxu0 0.0
        %759 = vmatpush1.msra.mxu0 0.0
        %760 = vmatprep.subr.mxu0 0.0
        %761 = vmatpush1.msra.mxu0 0.0
        %762 = vmatprep.subr.mxu0 0.0
        %763 = vmatpush1.msra.mxu0 0.0
        %764 = vmatprep.subr.mxu0 0.0
        %765 = vmatpush1.msra.mxu0 0.0
        %766 = vmatprep.subr.mxu0 0.0
        %767 = vmatpush1.msra.mxu0 %v734
        %768 = vmatprep.subr.mxu0 0.0
        %769 = vmatpush2.msra.mxu0 0.0
        %770 = vmatprep.subr.mxu0 0.0
        %771 = vmatpush2.msra.mxu0 0.0
        %772 = vmatprep.subr.mxu0 0.0
        %773 = vmatpush2.msra.mxu0 0.0
        %774 = vmatprep.subr.mxu0 0.0
        %775 = vmatpush2.msra.mxu0 0.0
        %776 = vmatprep.subr.mxu0 0.0
        %777 = vmatpush2.msra.mxu0 0.0
        %778 = vmatprep.subr.mxu0 0.0
        %779 = vmatpush2.msra.mxu0 0.0
        %780 = vmatprep.subr.mxu0 0.0
        %781 = vmatpush2.msra.mxu0 0.0
        %782 = vmatprep.subr.mxu0 0.0
        %783 = vmatpush2.msra.mxu0 0.0
        %784 = vmatprep.subr.mxu0 0.0
        %785 = vmatpush2.msra.mxu0 0.0
        %786 = vmatprep.subr.mxu0 0.0
        %787 = vmatpush2.msra.mxu0 0.0
        %788 = vmatprep.subr.mxu0 0.0
        %789 = vmatpush2.msra.mxu0 0.0
        %790 = vmatprep.subr.mxu0 0.0
        %791 = vmatpush2.msra.mxu0 0.0
        %792 = vmatprep.subr.mxu0 0.0
        %793 = vmatpush2.msra.mxu0 0.0
        %794 = vmatprep.subr.mxu0 0.0
        %795 = vmatpush2.msra.mxu0 0.0
        %796 = vmatprep.subr.mxu0 0.0
        %797 = vmatpush2.msra.mxu0 0.0
        %798 = vmatprep.subr.mxu0 0.0
        %799 = vmatpush2.msra.mxu0 0.0
        %800 = vmatprep.mubr.f32.mxu0 0.0
        %801 = vmatmul.mubr.f32.gmra.mxu0 %v728
        %v802 = vpop.f32.mrf.mxu0
        %v803 = vadd.f32 %v719, %v802
        %v804 = vpop.f32.mrf.mxu0
        %805 = vmatprep.mubr.f32.mxu0 0.0
        %806 = vmatmul.mubr.f32.gmra.mxu0 %v731
        %v807 = vpop.f32.mrf.mxu0
        %v808 = vadd.f32 %v724, %v807
        %v809 = vpop.f32.mrf.mxu0
        %810 = vdwg.mxu0
        %v812 = vlaneseq
        %v813 = vshrl.u32 %v812, 7
        %v814 = vsub.s32 0, %v813
        %v815 = vrot.slane %v524, %v814
        %v817 = vadd.f32 %v803, %v815
        %v818 = vadd.f32 %v808, %v815
        %vm819 = vcmp.gt.f32.partialorder %v817, 0.0
        %vm820 = vcmp.gt.f32.partialorder %v818, 0.0
        %v821 = vmul.f32 %v817, 0.01
        %v822 = vmul.f32 %v818, 0.01
        %v823 = vsel %vm819, %v817, %v821
        %v824 = vsel %vm820, %v818, %v822
        %825 = vmatprep.subr.mxu0 0.0
        %826 = vmatpush1.msra.mxu0 0.0
        %827 = vmatprep.subr.mxu0 0.0
        %828 = vmatpush1.msra.mxu0 0.0
        %829 = vmatprep.subr.mxu0 0.0
        %830 = vmatpush1.msra.mxu0 0.0
        %831 = vmatprep.subr.mxu0 0.0
        %832 = vmatpush1.msra.mxu0 0.0
        %833 = vmatprep.subr.mxu0 0.0
        %834 = vmatpush1.msra.mxu0 0.0
        %835 = vmatprep.subr.mxu0 0.0
        %836 = vmatpush1.msra.mxu0 0.0
        %837 = vmatprep.subr.mxu0 0.0
        %838 = vmatpush1.msra.mxu0 0.0
        %839 = vmatprep.subr.mxu0 0.0
        %840 = vmatpush1.msra.mxu0 0.0
        %841 = vmatprep.subr.mxu0 0.0
        %842 = vmatpush1.msra.mxu0 0.0
        %843 = vmatprep.subr.mxu0 0.0
        %844 = vmatpush1.msra.mxu0 0.0
        %845 = vmatprep.subr.mxu0 0.0
        %846 = vmatpush1.msra.mxu0 0.0
        %847 = vmatprep.subr.mxu0 0.0
        %848 = vmatpush1.msra.mxu0 0.0
        %849 = vmatprep.subr.mxu0 0.0
        %850 = vmatpush1.msra.mxu0 0.0
        %851 = vmatprep.subr.mxu0 0.0
        %852 = vmatpush1.msra.mxu0 0.0
        %853 = vmatprep.subr.mxu0 0.0
        %854 = vmatpush1.msra.mxu0 %v824
        %855 = vmatprep.subr.mxu0 0.0
        %856 = vmatpush1.msra.mxu0 %v823
        %857 = vmatprep.subr.mxu0 0.0
        %858 = vmatpush2.msra.mxu0 0.0
        %859 = vmatprep.subr.mxu0 0.0
        %860 = vmatpush2.msra.mxu0 0.0
        %861 = vmatprep.subr.mxu0 0.0
        %862 = vmatpush2.msra.mxu0 0.0
        %863 = vmatprep.subr.mxu0 0.0
        %864 = vmatpush2.msra.mxu0 0.0
        %865 = vmatprep.subr.mxu0 0.0
        %866 = vmatpush2.msra.mxu0 0.0
        %867 = vmatprep.subr.mxu0 0.0
        %868 = vmatpush2.msra.mxu0 0.0
        %869 = vmatprep.subr.mxu0 0.0
        %870 = vmatpush2.msra.mxu0 0.0
        %871 = vmatprep.subr.mxu0 0.0
        %872 = vmatpush2.msra.mxu0 0.0
        %873 = vmatprep.subr.mxu0 0.0
        %874 = vmatpush2.msra.mxu0 0.0
        %875 = vmatprep.subr.mxu0 0.0
        %876 = vmatpush2.msra.mxu0 0.0
        %877 = vmatprep.subr.mxu0 0.0
        %878 = vmatpush2.msra.mxu0 0.0
        %879 = vmatprep.subr.mxu0 0.0
        %880 = vmatpush2.msra.mxu0 0.0
        %881 = vmatprep.subr.mxu0 0.0
        %882 = vmatpush2.msra.mxu0 0.0
        %883 = vmatprep.subr.mxu0 0.0
        %884 = vmatpush2.msra.mxu0 0.0
        %885 = vmatprep.subr.mxu0 0.0
        %886 = vmatpush2.msra.mxu0 0.0
        %887 = vmatprep.subr.mxu0 0.0
        %888 = vmatpush2.msra.mxu0 0.0
        %889 = vmatprep.mubr.f32.mxu0 0.0
        %890 = vmatmul.mubr.f32.gmra.mxu0 %v559
        %v891 = vpop.f32.mrf.mxu0
        %v892 = vadd.f32 0.0, %v891
        %v893 = vpop.f32.mrf.mxu0
        %894 = vmatprep.mubr.f32.mxu0 0.0
        %895 = vmatmul.mubr.f32.gmra.mxu0 %v562
        %v896 = vpop.f32.mrf.mxu0
        %v897 = vadd.f32 0.0, %v896
        %v898 = vpop.f32.mrf.mxu0
        %899 = vdwg.mxu0
        %v900 = vld [vmem:[#allocation7] sm:$0xff]
        %v901 = vld [vmem:[%s5] sm:$0xff]
        %vm902 = vcmask 64512
        %v904 = vsel %vm902, %v823, 0
        %v907 = vsel %vm902, %v824, 0
        %909 = vmatprep.subr.mxu0 0.0
        %910 = vmatpush1.msra.mxu0 0.0
        %911 = vmatprep.subr.mxu0 0.0
        %912 = vmatpush1.msra.mxu0 0.0
        %913 = vmatprep.subr.mxu0 0.0
        %914 = vmatpush1.msra.mxu0 0.0
        %915 = vmatprep.subr.mxu0 0.0
        %916 = vmatpush1.msra.mxu0 0.0
        %917 = vmatprep.subr.mxu0 0.0
        %918 = vmatpush1.msra.mxu0 0.0
        %919 = vmatprep.subr.mxu0 0.0
        %920 = vmatpush1.msra.mxu0 0.0
        %921 = vmatprep.subr.mxu0 0.0
        %922 = vmatpush1.msra.mxu0 0.0
        %923 = vmatprep.subr.mxu0 0.0
        %924 = vmatpush1.msra.mxu0 0.0
        %925 = vmatprep.subr.mxu0 0.0
        %926 = vmatpush1.msra.mxu0 0.0
        %927 = vmatprep.subr.mxu0 0.0
        %928 = vmatpush1.msra.mxu0 0.0
        %929 = vmatprep.subr.mxu0 0.0
        %930 = vmatpush1.msra.mxu0 0.0
        %931 = vmatprep.subr.mxu0 0.0
        %932 = vmatpush1.msra.mxu0 0.0
        %933 = vmatprep.subr.mxu0 0.0
        %934 = vmatpush1.msra.mxu0 0.0
        %935 = vmatprep.subr.mxu0 0.0
        %936 = vmatpush1.msra.mxu0 0.0
        %937 = vmatprep.subr.mxu0 0.0
        %938 = vmatpush1.msra.mxu0 0.0
        %939 = vmatprep.subr.mxu0 0.0
        %940 = vmatpush1.msra.mxu0 %v901
        %941 = vmatprep.subr.mxu0 0.0
        %942 = vmatpush2.msra.mxu0 0.0
        %943 = vmatprep.subr.mxu0 0.0
        %944 = vmatpush2.msra.mxu0 0.0
        %945 = vmatprep.subr.mxu0 0.0
        %946 = vmatpush2.msra.mxu0 0.0
        %947 = vmatprep.subr.mxu0 0.0
        %948 = vmatpush2.msra.mxu0 0.0
        %949 = vmatprep.subr.mxu0 0.0
        %950 = vmatpush2.msra.mxu0 0.0
        %951 = vmatprep.subr.mxu0 0.0
        %952 = vmatpush2.msra.mxu0 0.0
        %953 = vmatprep.subr.mxu0 0.0
        %954 = vmatpush2.msra.mxu0 0.0
        %955 = vmatprep.subr.mxu0 0.0
        %956 = vmatpush2.msra.mxu0 0.0
        %957 = vmatprep.subr.mxu0 0.0
        %958 = vmatpush2.msra.mxu0 0.0
        %959 = vmatprep.subr.mxu0 0.0
        %960 = vmatpush2.msra.mxu0 0.0
        %961 = vmatprep.subr.mxu0 0.0
        %962 = vmatpush2.msra.mxu0 0.0
        %963 = vmatprep.subr.mxu0 0.0
        %964 = vmatpush2.msra.mxu0 0.0
        %965 = vmatprep.subr.mxu0 0.0
        %966 = vmatpush2.msra.mxu0 0.0
        %967 = vmatprep.subr.mxu0 0.0
        %968 = vmatpush2.msra.mxu0 0.0
        %969 = vmatprep.subr.mxu0 0.0
        %970 = vmatpush2.msra.mxu0 0.0
        %971 = vmatprep.subr.mxu0 0.0
        %972 = vmatpush2.msra.mxu0 0.0
        %973 = vmatprep.mubr.f32.mxu0 0.0
        %974 = vmatmul.mubr.f32.gmra.mxu0 %v904
        %v975 = vpop.f32.mrf.mxu0
        %v976 = vadd.f32 0.0, %v975
        %v977 = vpop.f32.mrf.mxu0
        %978 = vmatprep.mubr.f32.mxu0 0.0
        %979 = vmatmul.mubr.f32.gmra.mxu0 %v907
        %v980 = vpop.f32.mrf.mxu0
        %v981 = vadd.f32 0.0, %v980
        %v982 = vpop.f32.mrf.mxu0
        %983 = vdwg.mxu0
        %v985 = vsel %vm902, %v892, 0
        %v988 = vsel %vm902, %v897, 0
        %990 = vmatprep.subr.mxu0 0.0
        %991 = vmatpush1.msra.mxu0 0.0
        %992 = vmatprep.subr.mxu0 0.0
        %993 = vmatpush1.msra.mxu0 0.0
        %994 = vmatprep.subr.mxu0 0.0
        %995 = vmatpush1.msra.mxu0 0.0
        %996 = vmatprep.subr.mxu0 0.0
        %997 = vmatpush1.msra.mxu0 0.0
        %998 = vmatprep.subr.mxu0 0.0
        %999 = vmatpush1.msra.mxu0 0.0
        %1000 = vmatprep.subr.mxu0 0.0
        %1001 = vmatpush1.msra.mxu0 0.0
        %1002 = vmatprep.subr.mxu0 0.0
        %1003 = vmatpush1.msra.mxu0 0.0
        %1004 = vmatprep.subr.mxu0 0.0
        %1005 = vmatpush1.msra.mxu0 0.0
        %1006 = vmatprep.subr.mxu0 0.0
        %1007 = vmatpush1.msra.mxu0 0.0
        %1008 = vmatprep.subr.mxu0 0.0
        %1009 = vmatpush1.msra.mxu0 0.0
        %1010 = vmatprep.subr.mxu0 0.0
        %1011 = vmatpush1.msra.mxu0 0.0
        %1012 = vmatprep.subr.mxu0 0.0
        %1013 = vmatpush1.msra.mxu0 0.0
        %1014 = vmatprep.subr.mxu0 0.0
        %1015 = vmatpush1.msra.mxu0 0.0
        %1016 = vmatprep.subr.mxu0 0.0
        %1017 = vmatpush1.msra.mxu0 0.0
        %1018 = vmatprep.subr.mxu0 0.0
        %1019 = vmatpush1.msra.mxu0 0.0
        %1020 = vmatprep.subr.mxu0 0.0
        %1021 = vmatpush1.msra.mxu0 %v900
        %1022 = vmatprep.subr.mxu0 0.0
        %1023 = vmatpush2.msra.mxu0 0.0
        %1024 = vmatprep.subr.mxu0 0.0
        %1025 = vmatpush2.msra.mxu0 0.0
        %1026 = vmatprep.subr.mxu0 0.0
        %1027 = vmatpush2.msra.mxu0 0.0
        %1028 = vmatprep.subr.mxu0 0.0
        %1029 = vmatpush2.msra.mxu0 0.0
        %1030 = vmatprep.subr.mxu0 0.0
        %1031 = vmatpush2.msra.mxu0 0.0
        %1032 = vmatprep.subr.mxu0 0.0
        %1033 = vmatpush2.msra.mxu0 0.0
        %1034 = vmatprep.subr.mxu0 0.0
        %1035 = vmatpush2.msra.mxu0 0.0
        %1036 = vmatprep.subr.mxu0 0.0
        %1037 = vmatpush2.msra.mxu0 0.0
        %1038 = vmatprep.subr.mxu0 0.0
        %1039 = vmatpush2.msra.mxu0 0.0
        %1040 = vmatprep.subr.mxu0 0.0
        %1041 = vmatpush2.msra.mxu0 0.0
        %1042 = vmatprep.subr.mxu0 0.0
        %1043 = vmatpush2.msra.mxu0 0.0
        %1044 = vmatprep.subr.mxu0 0.0
        %1045 = vmatpush2.msra.mxu0 0.0
        %1046 = vmatprep.subr.mxu0 0.0
        %1047 = vmatpush2.msra.mxu0 0.0
        %1048 = vmatprep.subr.mxu0 0.0
        %1049 = vmatpush2.msra.mxu0 0.0
        %1050 = vmatprep.subr.mxu0 0.0
        %1051 = vmatpush2.msra.mxu0 0.0
        %1052 = vmatprep.subr.mxu0 0.0
        %1053 = vmatpush2.msra.mxu0 0.0
        %1054 = vmatprep.mubr.f32.mxu0 0.0
        %1055 = vmatmul.mubr.f32.gmra.mxu0 %v985
        %v1056 = vpop.f32.mrf.mxu0
        %v1057 = vadd.f32 %v976, %v1056
        %v1058 = vpop.f32.mrf.mxu0
        %1059 = vmatprep.mubr.f32.mxu0 0.0
        %1060 = vmatmul.mubr.f32.gmra.mxu0 %v988
        %v1061 = vpop.f32.mrf.mxu0
        %v1062 = vadd.f32 %v981, %v1061
        %v1063 = vpop.f32.mrf.mxu0
        %1064 = vdwg.mxu0
        %1065 = vrot.lane.b32.xlu0 %v815, 120
        %v1066 = vpop.permute.xlu0 %1065
        %v1068 = vadd.f32 %v1057, %v1066
        %v1069 = vadd.f32 %v1062, %v1066
        %vm1070 = vcmp.gt.f32.partialorder %v1068, 0.0
        %vm1071 = vcmp.gt.f32.partialorder %v1069, 0.0
        %v1072 = vmul.f32 %v1068, 0.01
        %v1073 = vmul.f32 %v1069, 0.01
        %v1074 = vsel %vm1070, %v1068, %v1072
        %v1075 = vsel %vm1071, %v1069, %v1073
        %1076 = vmatprep.subr.mxu0 0.0
        %1077 = vmatpush1.msra.mxu0 0.0
        %1078 = vmatprep.subr.mxu0 0.0
        %1079 = vmatpush1.msra.mxu0 0.0
        %1080 = vmatprep.subr.mxu0 0.0
        %1081 = vmatpush1.msra.mxu0 0.0
        %1082 = vmatprep.subr.mxu0 0.0
        %1083 = vmatpush1.msra.mxu0 0.0
        %1084 = vmatprep.subr.mxu0 0.0
        %1085 = vmatpush1.msra.mxu0 0.0
        %1086 = vmatprep.subr.mxu0 0.0
        %1087 = vmatpush1.msra.mxu0 0.0
        %1088 = vmatprep.subr.mxu0 0.0
        %1089 = vmatpush1.msra.mxu0 0.0
        %1090 = vmatprep.subr.mxu0 0.0
        %1091 = vmatpush1.msra.mxu0 0.0
        %1092 = vmatprep.subr.mxu0 0.0
        %1093 = vmatpush1.msra.mxu0 0.0
        %1094 = vmatprep.subr.mxu0 0.0
        %1095 = vmatpush1.msra.mxu0 0.0
        %1096 = vmatprep.subr.mxu0 0.0
        %1097 = vmatpush1.msra.mxu0 0.0
        %1098 = vmatprep.subr.mxu0 0.0
        %1099 = vmatpush1.msra.mxu0 0.0
        %1100 = vmatprep.subr.mxu0 0.0
        %1101 = vmatpush1.msra.mxu0 0.0
        %1102 = vmatprep.subr.mxu0 0.0
        %1103 = vmatpush1.msra.mxu0 0.0
        %1104 = vmatprep.subr.mxu0 0.0
        %1105 = vmatpush1.msra.mxu0 %v1075
        %1106 = vmatprep.subr.mxu0 0.0
        %1107 = vmatpush1.msra.mxu0 %v1074
        %1108 = vmatprep.subr.mxu0 0.0
        %1109 = vmatpush2.msra.mxu0 0.0
        %1110 = vmatprep.subr.mxu0 0.0
        %1111 = vmatpush2.msra.mxu0 0.0
        %1112 = vmatprep.subr.mxu0 0.0
        %1113 = vmatpush2.msra.mxu0 0.0
        %1114 = vmatprep.subr.mxu0 0.0
        %1115 = vmatpush2.msra.mxu0 0.0
        %1116 = vmatprep.subr.mxu0 0.0
        %1117 = vmatpush2.msra.mxu0 0.0
        %1118 = vmatprep.subr.mxu0 0.0
        %1119 = vmatpush2.msra.mxu0 0.0
        %1120 = vmatprep.subr.mxu0 0.0
        %1121 = vmatpush2.msra.mxu0 0.0
        %1122 = vmatprep.subr.mxu0 0.0
        %1123 = vmatpush2.msra.mxu0 0.0
        %1124 = vmatprep.subr.mxu0 0.0
        %1125 = vmatpush2.msra.mxu0 0.0
        %1126 = vmatprep.subr.mxu0 0.0
        %1127 = vmatpush2.msra.mxu0 0.0
        %1128 = vmatprep.subr.mxu0 0.0
        %1129 = vmatpush2.msra.mxu0 0.0
        %1130 = vmatprep.subr.mxu0 0.0
        %1131 = vmatpush2.msra.mxu0 0.0
        %1132 = vmatprep.subr.mxu0 0.0
        %1133 = vmatpush2.msra.mxu0 0.0
        %1134 = vmatprep.subr.mxu0 0.0
        %1135 = vmatpush2.msra.mxu0 0.0
        %1136 = vmatprep.subr.mxu0 0.0
        %1137 = vmatpush2.msra.mxu0 0.0
        %1138 = vmatprep.subr.mxu0 0.0
        %1139 = vmatpush2.msra.mxu0 0.0
        %1140 = vmatprep.mubr.f32.mxu0 0.0
        %1141 = vmatmul.mubr.f32.gmra.mxu0 %v559
        %v1142 = vpop.f32.mrf.mxu0
        %v1143 = vadd.f32 0.0, %v1142
        %v1144 = vpop.f32.mrf.mxu0
        %1145 = vmatprep.mubr.f32.mxu0 0.0
        %1146 = vmatmul.mubr.f32.gmra.mxu0 %v562
        %v1147 = vpop.f32.mrf.mxu0
        %v1148 = vadd.f32 0.0, %v1147
        %v1149 = vpop.f32.mrf.mxu0
        %1150 = vdwg.mxu0
        %v1151 = vld [vmem:[%s6] sm:$0xff]
        %v1152 = vld [vmem:[%s6 + $0x8] sm:$0xff]
        %v1153 = vld [vmem:[%s7] sm:$0xff]
        %v1154 = vld [vmem:[%s7 + $0x8] sm:$0xff]
        %v1156 = vsel %vm557, %v1074, 0
        %v1159 = vsel %vm557, %v1075, 0
        %1161 = vmatprep.subr.mxu0 0.0
        %1162 = vmatpush1.msra.mxu0 0.0
        %1163 = vmatprep.subr.mxu0 0.0
        %1164 = vmatpush1.msra.mxu0 0.0
        %1165 = vmatprep.subr.mxu0 0.0
        %1166 = vmatpush1.msra.mxu0 0.0
        %1167 = vmatprep.subr.mxu0 0.0
        %1168 = vmatpush1.msra.mxu0 0.0
        %1169 = vmatprep.subr.mxu0 0.0
        %1170 = vmatpush1.msra.mxu0 0.0
        %1171 = vmatprep.subr.mxu0 0.0
        %1172 = vmatpush1.msra.mxu0 0.0
        %1173 = vmatprep.subr.mxu0 0.0
        %1174 = vmatpush1.msra.mxu0 0.0
        %1175 = vmatprep.subr.mxu0 0.0
        %1176 = vmatpush1.msra.mxu0 0.0
        %1177 = vmatprep.subr.mxu0 0.0
        %1178 = vmatpush1.msra.mxu0 0.0
        %1179 = vmatprep.subr.mxu0 0.0
        %1180 = vmatpush1.msra.mxu0 0.0
        %1181 = vmatprep.subr.mxu0 0.0
        %1182 = vmatpush1.msra.mxu0 0.0
        %1183 = vmatprep.subr.mxu0 0.0
        %1184 = vmatpush1.msra.mxu0 0.0
        %1185 = vmatprep.subr.mxu0 0.0
        %1186 = vmatpush1.msra.mxu0 0.0
        %1187 = vmatprep.subr.mxu0 0.0
        %1188 = vmatpush1.msra.mxu0 0.0
        %1189 = vmatprep.subr.mxu0 0.0
        %1190 = vmatpush1.msra.mxu0 %v1154
        %1191 = vmatprep.subr.mxu0 0.0
        %1192 = vmatpush1.msra.mxu0 %v1153
        %1193 = vmatprep.subr.mxu0 0.0
        %1194 = vmatpush2.msra.mxu0 0.0
        %1195 = vmatprep.subr.mxu0 0.0
        %1196 = vmatpush2.msra.mxu0 0.0
        %1197 = vmatprep.subr.mxu0 0.0
        %1198 = vmatpush2.msra.mxu0 0.0
        %1199 = vmatprep.subr.mxu0 0.0
        %1200 = vmatpush2.msra.mxu0 0.0
        %1201 = vmatprep.subr.mxu0 0.0
        %1202 = vmatpush2.msra.mxu0 0.0
        %1203 = vmatprep.subr.mxu0 0.0
        %1204 = vmatpush2.msra.mxu0 0.0
        %1205 = vmatprep.subr.mxu0 0.0
        %1206 = vmatpush2.msra.mxu0 0.0
        %1207 = vmatprep.subr.mxu0 0.0
        %1208 = vmatpush2.msra.mxu0 0.0
        %1209 = vmatprep.subr.mxu0 0.0
        %1210 = vmatpush2.msra.mxu0 0.0
        %1211 = vmatprep.subr.mxu0 0.0
        %1212 = vmatpush2.msra.mxu0 0.0
        %1213 = vmatprep.subr.mxu0 0.0
        %1214 = vmatpush2.msra.mxu0 0.0
        %1215 = vmatprep.subr.mxu0 0.0
        %1216 = vmatpush2.msra.mxu0 0.0
        %1217 = vmatprep.subr.mxu0 0.0
        %1218 = vmatpush2.msra.mxu0 0.0
        %1219 = vmatprep.subr.mxu0 0.0
        %1220 = vmatpush2.msra.mxu0 0.0
        %1221 = vmatprep.subr.mxu0 0.0
        %1222 = vmatpush2.msra.mxu0 0.0
        %1223 = vmatprep.subr.mxu0 0.0
        %1224 = vmatpush2.msra.mxu0 0.0
        %1225 = vmatprep.mubr.f32.mxu0 0.0
        %1226 = vmatmul.mubr.f32.gmra.mxu0 %v1156
        %v1227 = vpop.f32.mrf.mxu0
        %v1228 = vadd.f32 0.0, %v1227
        %v1229 = vpop.f32.mrf.mxu0
        %1230 = vmatprep.mubr.f32.mxu0 0.0
        %1231 = vmatmul.mubr.f32.gmra.mxu0 %v1159
        %v1232 = vpop.f32.mrf.mxu0
        %v1233 = vadd.f32 0.0, %v1232
        %v1234 = vpop.f32.mrf.mxu0
        %1235 = vdwg.mxu0
        %v1237 = vsel %vm557, %v1143, 0
        %v1240 = vsel %vm557, %v1148, 0
        %1242 = vmatprep.subr.mxu0 0.0
        %1243 = vmatpush1.msra.mxu0 0.0
        %1244 = vmatprep.subr.mxu0 0.0
        %1245 = vmatpush1.msra.mxu0 0.0
        %1246 = vmatprep.subr.mxu0 0.0
        %1247 = vmatpush1.msra.mxu0 0.0
        %1248 = vmatprep.subr.mxu0 0.0
        %1249 = vmatpush1.msra.mxu0 0.0
        %1250 = vmatprep.subr.mxu0 0.0
        %1251 = vmatpush1.msra.mxu0 0.0
        %1252 = vmatprep.subr.mxu0 0.0
        %1253 = vmatpush1.msra.mxu0 0.0
        %1254 = vmatprep.subr.mxu0 0.0
        %1255 = vmatpush1.msra.mxu0 0.0
        %1256 = vmatprep.subr.mxu0 0.0
        %1257 = vmatpush1.msra.mxu0 0.0
        %1258 = vmatprep.subr.mxu0 0.0
        %1259 = vmatpush1.msra.mxu0 0.0
        %1260 = vmatprep.subr.mxu0 0.0
        %1261 = vmatpush1.msra.mxu0 0.0
        %1262 = vmatprep.subr.mxu0 0.0
        %1263 = vmatpush1.msra.mxu0 0.0
        %1264 = vmatprep.subr.mxu0 0.0
        %1265 = vmatpush1.msra.mxu0 0.0
        %1266 = vmatprep.subr.mxu0 0.0
        %1267 = vmatpush1.msra.mxu0 0.0
        %1268 = vmatprep.subr.mxu0 0.0
        %1269 = vmatpush1.msra.mxu0 0.0
        %1270 = vmatprep.subr.mxu0 0.0
        %1271 = vmatpush1.msra.mxu0 %v1152
        %1272 = vmatprep.subr.mxu0 0.0
        %1273 = vmatpush1.msra.mxu0 %v1151
        %1274 = vmatprep.subr.mxu0 0.0
        %1275 = vmatpush2.msra.mxu0 0.0
        %1276 = vmatprep.subr.mxu0 0.0
        %1277 = vmatpush2.msra.mxu0 0.0
        %1278 = vmatprep.subr.mxu0 0.0
        %1279 = vmatpush2.msra.mxu0 0.0
        %1280 = vmatprep.subr.mxu0 0.0
        %1281 = vmatpush2.msra.mxu0 0.0
        %1282 = vmatprep.subr.mxu0 0.0
        %1283 = vmatpush2.msra.mxu0 0.0
        %1284 = vmatprep.subr.mxu0 0.0
        %1285 = vmatpush2.msra.mxu0 0.0
        %1286 = vmatprep.subr.mxu0 0.0
        %1287 = vmatpush2.msra.mxu0 0.0
        %1288 = vmatprep.subr.mxu0 0.0
        %1289 = vmatpush2.msra.mxu0 0.0
        %1290 = vmatprep.subr.mxu0 0.0
        %1291 = vmatpush2.msra.mxu0 0.0
        %1292 = vmatprep.subr.mxu0 0.0
        %1293 = vmatpush2.msra.mxu0 0.0
        %1294 = vmatprep.subr.mxu0 0.0
        %1295 = vmatpush2.msra.mxu0 0.0
        %1296 = vmatprep.subr.mxu0 0.0
        %1297 = vmatpush2.msra.mxu0 0.0
        %1298 = vmatprep.subr.mxu0 0.0
        %1299 = vmatpush2.msra.mxu0 0.0
        %1300 = vmatprep.subr.mxu0 0.0
        %1301 = vmatpush2.msra.mxu0 0.0
        %1302 = vmatprep.subr.mxu0 0.0
        %1303 = vmatpush2.msra.mxu0 0.0
        %1304 = vmatprep.subr.mxu0 0.0
        %1305 = vmatpush2.msra.mxu0 0.0
        %1306 = vmatprep.mubr.f32.mxu0 0.0
        %1307 = vmatmul.mubr.f32.gmra.mxu0 %v1237
        %v1308 = vpop.f32.mrf.mxu0
        %v1309 = vadd.f32 %v1228, %v1308
        %v1310 = vpop.f32.mrf.mxu0
        %1311 = vmatprep.mubr.f32.mxu0 0.0
        %1312 = vmatmul.mubr.f32.gmra.mxu0 %v1240
        %v1313 = vpop.f32.mrf.mxu0
        %v1314 = vadd.f32 %v1233, %v1313
        %v1315 = vpop.f32.mrf.mxu0
        %1316 = vdwg.mxu0
        %1317 = vrot.lane.b32.xlu0 %v815, 104
        %v1318 = vpop.permute.xlu0 %1317
        %v1320 = vadd.f32 %v1309, %v1318
        %v1321 = vadd.f32 %v1314, %v1318
        %vm1322 = vcmp.gt.f32.partialorder %v1320, 0.0
        %vm1323 = vcmp.gt.f32.partialorder %v1321, 0.0
        %v1324 = vmul.f32 %v1320, 0.01
        %v1325 = vmul.f32 %v1321, 0.01
        %v1326 = vsel %vm1322, %v1320, %v1324
        %v1327 = vsel %vm1323, %v1321, %v1325
        %v1329 = vsel %vm902, %v1326, 0
        %v1332 = vsel %vm902, %v1327, 0
        %1334 = vmatprep.subr.mxu0 0.0
        %1335 = vmatpush1.xpose.msra.mxu0 0.0
        %1336 = vmatprep.subr.mxu0 0.0
        %1337 = vmatpush1.xpose.msra.mxu0 0.0
        %1338 = vmatprep.subr.mxu0 0.0
        %1339 = vmatpush1.xpose.msra.mxu0 0.0
        %1340 = vmatprep.subr.mxu0 0.0
        %1341 = vmatpush1.xpose.msra.mxu0 0.0
        %1342 = vmatprep.subr.mxu0 0.0
        %1343 = vmatpush1.xpose.msra.mxu0 0.0
        %1344 = vmatprep.subr.mxu0 0.0
        %1345 = vmatpush1.xpose.msra.mxu0 0.0
        %1346 = vmatprep.subr.mxu0 0.0
        %1347 = vmatpush1.xpose.msra.mxu0 0.0
        %1348 = vmatprep.subr.mxu0 0.0
        %1349 = vmatpush1.xpose.msra.mxu0 0.0
        %1350 = vmatprep.subr.mxu0 0.0
        %1351 = vmatpush1.xpose.msra.mxu0 0.0
        %1352 = vmatprep.subr.mxu0 0.0
        %1353 = vmatpush1.xpose.msra.mxu0 0.0
        %1354 = vmatprep.subr.mxu0 0.0
        %1355 = vmatpush1.xpose.msra.mxu0 0.0
        %1356 = vmatprep.subr.mxu0 0.0
        %1357 = vmatpush1.xpose.msra.mxu0 0.0
        %1358 = vmatprep.subr.mxu0 0.0
        %1359 = vmatpush1.xpose.msra.mxu0 0.0
        %1360 = vmatprep.subr.mxu0 0.0
        %1361 = vmatpush1.xpose.msra.mxu0 0.0
        %1362 = vmatprep.subr.mxu0 0.0
        %1363 = vmatpush1.xpose.msra.mxu0 %v1332
        %1364 = vmatprep.subr.mxu0 0.0
        %1365 = vmatpush1.xpose.msra.mxu0 %v1329
        %1366 = vmatprep.subr.mxu0 0.0
        %1367 = vmatpush2.xpose.msra.mxu0 0.0
        %1368 = vmatprep.subr.mxu0 0.0
        %1369 = vmatpush2.xpose.msra.mxu0 0.0
        %1370 = vmatprep.subr.mxu0 0.0
        %1371 = vmatpush2.xpose.msra.mxu0 0.0
        %1372 = vmatprep.subr.mxu0 0.0
        %1373 = vmatpush2.xpose.msra.mxu0 0.0
        %1374 = vmatprep.subr.mxu0 0.0
        %1375 = vmatpush2.xpose.msra.mxu0 0.0
        %1376 = vmatprep.subr.mxu0 0.0
        %1377 = vmatpush2.xpose.msra.mxu0 0.0
        %1378 = vmatprep.subr.mxu0 0.0
        %1379 = vmatpush2.xpose.msra.mxu0 0.0
        %1380 = vmatprep.subr.mxu0 0.0
        %1381 = vmatpush2.xpose.msra.mxu0 0.0
        %1382 = vmatprep.subr.mxu0 0.0
        %1383 = vmatpush2.xpose.msra.mxu0 0.0
        %1384 = vmatprep.subr.mxu0 0.0
        %1385 = vmatpush2.xpose.msra.mxu0 0.0
        %1386 = vmatprep.subr.mxu0 0.0
        %1387 = vmatpush2.xpose.msra.mxu0 0.0
        %1388 = vmatprep.subr.mxu0 0.0
        %1389 = vmatpush2.xpose.msra.mxu0 0.0
        %1390 = vmatprep.subr.mxu0 0.0
        %1391 = vmatpush2.xpose.msra.mxu0 0.0
        %1392 = vmatprep.subr.mxu0 0.0
        %1393 = vmatpush2.xpose.msra.mxu0 0.0
        %1394 = vmatprep.subr.mxu0 0.0
        %1395 = vmatpush2.xpose.msra.mxu0 0.0
        %1396 = vmatprep.subr.mxu0 0.0
        %1397 = vmatpush2.xpose.msra.mxu0 0.0
        %1398 = vmatprep.mubr.f32.mxu0 0.0
        %1399 = vmatmul.mubr.f32.gmra.mxu0 %v1329
        %v1400 = vpop.f32.mrf.mxu0
        %v1401 = vadd.f32 0.0, %v1400
        %v1402 = vpop.f32.mrf.mxu0
        %1403 = vmatprep.mubr.f32.mxu0 0.0
        %1404 = vmatmul.mubr.f32.gmra.mxu0 %v1332
        %v1405 = vpop.f32.mrf.mxu0
        %v1406 = vadd.f32 0.0, %v1405
        %v1407 = vpop.f32.mrf.mxu0
        %1408 = vdwg.mxu0
        %v1409 = vxor.u32 %v1401, 2147483648
        %v1410 = vxor.u32 %v1406, 2147483648
        %v1411 = vmul.f32 %v1409, 1.442695
        %v1412 = vpow.pop %v1411
        %v1413 = vmul.f32 %v1410, 1.442695
        %v1414 = vpow.pop %v1413
        %v1415 = vadd.f32 %v1412, 1.0
        %v1416 = vadd.f32 %v1414, 1.0
        %v1417 = vrcp.pop %v1415
        %v1418 = vmul.f32 1.0, %v1417
        %v1419 = vrcp.pop %v1416
        %v1420 = vmul.f32 1.0, %v1419
        %1421 = vst.msk [vmem:[%s490] sm:$0xff] %vm557, %v1418
        %1422 = vst.msk [vmem:[%s490 + $0x8] sm:$0xff] %vm557, %v1420
        %1423 = vrot.lane.b32.xlu0 %v1326, 120
        %v1424 = vpop.permute.xlu0 %1423
        %1425 = vrot.lane.b32.xlu0 %v1327, 120
        %v1426 = vpop.permute.xlu0 %1425
        %1429 = vmatprep.subr.mxu0 0.0
        %1430 = vmatpush1.msra.mxu0 0.0
        %1431 = vmatprep.subr.mxu0 0.0
        %1432 = vmatpush1.msra.mxu0 0.0
        %1433 = vmatprep.subr.mxu0 0.0
        %1434 = vmatpush1.msra.mxu0 0.0
        %1435 = vmatprep.subr.mxu0 0.0
        %1436 = vmatpush1.msra.mxu0 0.0
        %1437 = vmatprep.subr.mxu0 0.0
        %1438 = vmatpush1.msra.mxu0 0.0
        %1439 = vmatprep.subr.mxu0 0.0
        %1440 = vmatpush1.msra.mxu0 0.0
        %1441 = vmatprep.subr.mxu0 0.0
        %1442 = vmatpush1.msra.mxu0 0.0
        %1443 = vmatprep.subr.mxu0 0.0
        %1444 = vmatpush1.msra.mxu0 0.0
        %1445 = vmatprep.subr.mxu0 0.0
        %1446 = vmatpush1.msra.mxu0 0.0
        %1447 = vmatprep.subr.mxu0 0.0
        %1448 = vmatpush1.msra.mxu0 0.0
        %1449 = vmatprep.subr.mxu0 0.0
        %1450 = vmatpush1.msra.mxu0 0.0
        %1451 = vmatprep.subr.mxu0 0.0
        %1452 = vmatpush1.msra.mxu0 0.0
        %1453 = vmatprep.subr.mxu0 0.0
        %1454 = vmatpush1.msra.mxu0 0.0
        %1455 = vmatprep.subr.mxu0 0.0
        %1456 = vmatpush1.msra.mxu0 0.0
        %1457 = vmatprep.subr.mxu0 0.0
        %1458 = vmatpush1.msra.mxu0 %v1426
        %1459 = vmatprep.subr.mxu0 0.0
        %1460 = vmatpush1.msra.mxu0 %v1424
        %1461 = vmatprep.subr.mxu0 0.0
        %1462 = vmatpush2.msra.mxu0 0.0
        %1463 = vmatprep.subr.mxu0 0.0
        %1464 = vmatpush2.msra.mxu0 0.0
        %1465 = vmatprep.subr.mxu0 0.0
        %1466 = vmatpush2.msra.mxu0 0.0
        %1467 = vmatprep.subr.mxu0 0.0
        %1468 = vmatpush2.msra.mxu0 0.0
        %1469 = vmatprep.subr.mxu0 0.0
        %1470 = vmatpush2.msra.mxu0 0.0
        %1471 = vmatprep.subr.mxu0 0.0
        %1472 = vmatpush2.msra.mxu0 0.0
        %1473 = vmatprep.subr.mxu0 0.0
        %1474 = vmatpush2.msra.mxu0 0.0
        %1475 = vmatprep.subr.mxu0 0.0
        %1476 = vmatpush2.msra.mxu0 0.0
        %1477 = vmatprep.subr.mxu0 0.0
        %1478 = vmatpush2.msra.mxu0 0.0
        %1479 = vmatprep.subr.mxu0 0.0
        %1480 = vmatpush2.msra.mxu0 0.0
        %1481 = vmatprep.subr.mxu0 0.0
        %1482 = vmatpush2.msra.mxu0 0.0
        %1483 = vmatprep.subr.mxu0 0.0
        %1484 = vmatpush2.msra.mxu0 0.0
        %1485 = vmatprep.subr.mxu0 0.0
        %1486 = vmatpush2.msra.mxu0 0.0
        %1487 = vmatprep.subr.mxu0 0.0
        %1488 = vmatpush2.msra.mxu0 0.0
        %1489 = vmatprep.subr.mxu0 0.0
        %1490 = vmatpush2.msra.mxu0 0.0
        %1491 = vmatprep.subr.mxu0 0.0
        %1492 = vmatpush2.msra.mxu0 0.0
        %1493 = vmatprep.mubr.f32.mxu0 0.0
        %1494 = vmatmul.mubr.f32.gmra.mxu0 %v559
        %v1495 = vpop.f32.mrf.mxu0
        %v1496 = vadd.f32 0.0, %v1495
        %v1497 = vpop.f32.mrf.mxu0
        %1498 = vmatprep.mubr.f32.mxu0 0.0
        %1499 = vmatmul.mubr.f32.gmra.mxu0 %v562
        %v1500 = vpop.f32.mrf.mxu0
        %v1501 = vadd.f32 0.0, %v1500
        %v1502 = vpop.f32.mrf.mxu0
        %1503 = vdwg.mxu0
        %v1504 = vld [vmem:[%s8] sm:$0xff]
        %v1505 = vld [vmem:[%s9] sm:$0xff]
        %v1506 = vsel %vm902, %v1424, 0
        %v1508 = vsel %vm902, %v1426, 0
        %1510 = vmatprep.subr.mxu0 0.0
        %1511 = vmatpush1.msra.mxu0 0.0
        %1512 = vmatprep.subr.mxu0 0.0
        %1513 = vmatpush1.msra.mxu0 0.0
        %1514 = vmatprep.subr.mxu0 0.0
        %1515 = vmatpush1.msra.mxu0 0.0
        %1516 = vmatprep.subr.mxu0 0.0
        %1517 = vmatpush1.msra.mxu0 0.0
        %1518 = vmatprep.subr.mxu0 0.0
        %1519 = vmatpush1.msra.mxu0 0.0
        %1520 = vmatprep.subr.mxu0 0.0
        %1521 = vmatpush1.msra.mxu0 0.0
        %1522 = vmatprep.subr.mxu0 0.0
        %1523 = vmatpush1.msra.mxu0 0.0
        %1524 = vmatprep.subr.mxu0 0.0
        %1525 = vmatpush1.msra.mxu0 0.0
        %1526 = vmatprep.subr.mxu0 0.0
        %1527 = vmatpush1.msra.mxu0 0.0
        %1528 = vmatprep.subr.mxu0 0.0
        %1529 = vmatpush1.msra.mxu0 0.0
        %1530 = vmatprep.subr.mxu0 0.0
        %1531 = vmatpush1.msra.mxu0 0.0
        %1532 = vmatprep.subr.mxu0 0.0
        %1533 = vmatpush1.msra.mxu0 0.0
        %1534 = vmatprep.subr.mxu0 0.0
        %1535 = vmatpush1.msra.mxu0 0.0
        %1536 = vmatprep.subr.mxu0 0.0
        %1537 = vmatpush1.msra.mxu0 0.0
        %1538 = vmatprep.subr.mxu0 0.0
        %1539 = vmatpush1.msra.mxu0 0.0
        %1540 = vmatprep.subr.mxu0 0.0
        %1541 = vmatpush1.msra.mxu0 %v1505
        %1542 = vmatprep.subr.mxu0 0.0
        %1543 = vmatpush2.msra.mxu0 0.0
        %1544 = vmatprep.subr.mxu0 0.0
        %1545 = vmatpush2.msra.mxu0 0.0
        %1546 = vmatprep.subr.mxu0 0.0
        %1547 = vmatpush2.msra.mxu0 0.0
        %1548 = vmatprep.subr.mxu0 0.0
        %1549 = vmatpush2.msra.mxu0 0.0
        %1550 = vmatprep.subr.mxu0 0.0
        %1551 = vmatpush2.msra.mxu0 0.0
        %1552 = vmatprep.subr.mxu0 0.0
        %1553 = vmatpush2.msra.mxu0 0.0
        %1554 = vmatprep.subr.mxu0 0.0
        %1555 = vmatpush2.msra.mxu0 0.0
        %1556 = vmatprep.subr.mxu0 0.0
        %1557 = vmatpush2.msra.mxu0 0.0
        %1558 = vmatprep.subr.mxu0 0.0
        %1559 = vmatpush2.msra.mxu0 0.0
        %1560 = vmatprep.subr.mxu0 0.0
        %1561 = vmatpush2.msra.mxu0 0.0
        %1562 = vmatprep.subr.mxu0 0.0
        %1563 = vmatpush2.msra.mxu0 0.0
        %1564 = vmatprep.subr.mxu0 0.0
        %1565 = vmatpush2.msra.mxu0 0.0
        %1566 = vmatprep.subr.mxu0 0.0
        %1567 = vmatpush2.msra.mxu0 0.0
        %1568 = vmatprep.subr.mxu0 0.0
        %1569 = vmatpush2.msra.mxu0 0.0
        %1570 = vmatprep.subr.mxu0 0.0
        %1571 = vmatpush2.msra.mxu0 0.0
        %1572 = vmatprep.subr.mxu0 0.0
        %1573 = vmatpush2.msra.mxu0 0.0
        %1574 = vmatprep.mubr.f32.mxu0 0.0
        %1575 = vmatmul.mubr.f32.gmra.mxu0 %v1506
        %v1576 = vpop.f32.mrf.mxu0
        %v1577 = vadd.f32 0.0, %v1576
        %v1578 = vpop.f32.mrf.mxu0
        %1579 = vmatprep.mubr.f32.mxu0 0.0
        %1580 = vmatmul.mubr.f32.gmra.mxu0 %v1508
        %v1581 = vpop.f32.mrf.mxu0
        %v1582 = vadd.f32 0.0, %v1581
        %v1583 = vpop.f32.mrf.mxu0
        %1584 = vdwg.mxu0
        %v1586 = vsel %vm902, %v1496, 0
        %v1589 = vsel %vm902, %v1501, 0
        %1591 = vmatprep.subr.mxu0 0.0
        %1592 = vmatpush1.msra.mxu0 0.0
        %1593 = vmatprep.subr.mxu0 0.0
        %1594 = vmatpush1.msra.mxu0 0.0
        %1595 = vmatprep.subr.mxu0 0.0
        %1596 = vmatpush1.msra.mxu0 0.0
        %1597 = vmatprep.subr.mxu0 0.0
        %1598 = vmatpush1.msra.mxu0 0.0
        %1599 = vmatprep.subr.mxu0 0.0
        %1600 = vmatpush1.msra.mxu0 0.0
        %1601 = vmatprep.subr.mxu0 0.0
        %1602 = vmatpush1.msra.mxu0 0.0
        %1603 = vmatprep.subr.mxu0 0.0
        %1604 = vmatpush1.msra.mxu0 0.0
        %1605 = vmatprep.subr.mxu0 0.0
        %1606 = vmatpush1.msra.mxu0 0.0
        %1607 = vmatprep.subr.mxu0 0.0
        %1608 = vmatpush1.msra.mxu0 0.0
        %1609 = vmatprep.subr.mxu0 0.0
        %1610 = vmatpush1.msra.mxu0 0.0
        %1611 = vmatprep.subr.mxu0 0.0
        %1612 = vmatpush1.msra.mxu0 0.0
        %1613 = vmatprep.subr.mxu0 0.0
        %1614 = vmatpush1.msra.mxu0 0.0
        %1615 = vmatprep.subr.mxu0 0.0
        %1616 = vmatpush1.msra.mxu0 0.0
        %1617 = vmatprep.subr.mxu0 0.0
        %1618 = vmatpush1.msra.mxu0 0.0
        %1619 = vmatprep.subr.mxu0 0.0
        %1620 = vmatpush1.msra.mxu0 0.0
        %1621 = vmatprep.subr.mxu0 0.0
        %1622 = vmatpush1.msra.mxu0 %v1504
        %1623 = vmatprep.subr.mxu0 0.0
        %1624 = vmatpush2.msra.mxu0 0.0
        %1625 = vmatprep.subr.mxu0 0.0
        %1626 = vmatpush2.msra.mxu0 0.0
        %1627 = vmatprep.subr.mxu0 0.0
        %1628 = vmatpush2.msra.mxu0 0.0
        %1629 = vmatprep.subr.mxu0 0.0
        %1630 = vmatpush2.msra.mxu0 0.0
        %1631 = vmatprep.subr.mxu0 0.0
        %1632 = vmatpush2.msra.mxu0 0.0
        %1633 = vmatprep.subr.mxu0 0.0
        %1634 = vmatpush2.msra.mxu0 0.0
        %1635 = vmatprep.subr.mxu0 0.0
        %1636 = vmatpush2.msra.mxu0 0.0
        %1637 = vmatprep.subr.mxu0 0.0
        %1638 = vmatpush2.msra.mxu0 0.0
        %1639 = vmatprep.subr.mxu0 0.0
        %1640 = vmatpush2.msra.mxu0 0.0
        %1641 = vmatprep.subr.mxu0 0.0
        %1642 = vmatpush2.msra.mxu0 0.0
        %1643 = vmatprep.subr.mxu0 0.0
        %1644 = vmatpush2.msra.mxu0 0.0
        %1645 = vmatprep.subr.mxu0 0.0
        %1646 = vmatpush2.msra.mxu0 0.0
        %1647 = vmatprep.subr.mxu0 0.0
        %1648 = vmatpush2.msra.mxu0 0.0
        %1649 = vmatprep.subr.mxu0 0.0
        %1650 = vmatpush2.msra.mxu0 0.0
        %1651 = vmatprep.subr.mxu0 0.0
        %1652 = vmatpush2.msra.mxu0 0.0
        %1653 = vmatprep.subr.mxu0 0.0
        %1654 = vmatpush2.msra.mxu0 0.0
        %1655 = vmatprep.mubr.f32.mxu0 0.0
        %1656 = vmatmul.mubr.f32.gmra.mxu0 %v1586
        %v1657 = vpop.f32.mrf.mxu0
        %v1658 = vadd.f32 %v1577, %v1657
        %v1659 = vpop.f32.mrf.mxu0
        %1660 = vmatprep.mubr.f32.mxu0 0.0
        %1661 = vmatmul.mubr.f32.gmra.mxu0 %v1589
        %v1662 = vpop.f32.mrf.mxu0
        %v1663 = vadd.f32 %v1582, %v1662
        %v1664 = vpop.f32.mrf.mxu0
        %1665 = vdwg.mxu0
        %1666 = vrot.lane.b32.xlu0 %v815, 88
        %v1667 = vpop.permute.xlu0 %1666
        %v1669 = vadd.f32 %v1658, %v1667
        %v1670 = vadd.f32 %v1663, %v1667
        %1671 = vst.msk [vmem:[%s519] sm:$0xff] %vm641, %v1669
        %1672 = vst.msk [vmem:[%s519 + $0x8] sm:$0xff] %vm641, %v1670
        %1673 = vst.msk [vmem:[%s504] sm:$0xff] %vm557, %v1074
        %1674 = vst.msk [vmem:[%s504 + $0x8] sm:$0xff] %vm557, %v1075
        %s1675 = sand.u32 %s282, 1
        %s1676 = scalar_lea.sflag [#allocation4], %s1675
        %s1677 = sand.u32 %s282, 1
        %s1678 = smul.addr %s1677, 16
        %s1679 = scalar_lea.vmem [#allocation8], %s1678
        %p1680 = scmp.lt.s32.totalorder %s33, 1
        %s1681 = scalar_select %p1680, %s33, 1
        %s1682 = smul.addr %s1681, 2
        %s1683 = smul.addr %s1682, 8
        %s1684 = scalar_lea.vmem %s12, %s1683
        %s1685 = sand.u32 %s334, 1
        %s1686 = scalar_lea.sflag [#allocation10], %s1685
        %s1687 = sand.u32 %s334, 1
        %s1688 = smul.addr %s1687, 16
        %s1689 = scalar_lea.vmem [#allocation9], %s1688
        // Predicated region
        $region77: #{tpu_custom_call.1} parent=63 // pred_check
          %p1690 = pneg %p292
        $region78: #{tpu_custom_call.1} parent=63 // pred_check_branch
          %1692 = sbr.rel (%p1690) target = $region80
        $region79: #{tpu_custom_call.1} parent=63 // pred_region
          %s1694 = ssub.s32 256, 256
          %1695 = vsyncadd %s1676, %s1694
          %s1696 = smul.addr %s33, 2
          %s1697 = smul.addr %s1696, 128
          %s1698 = scalar_lea.hbm %s11, %s1697
          %s1699 = sshll.u32 %s1679, 4
          %s1700 = int_to_ptr.vmem [resolvable:$true] %s1699
          %1705 = dma.vmem_to_hbm [thread:$0]  %s1700, 256, %s1698, %s1676, 128, 128, 8
        $region80: #{tpu_custom_call.1} parent=63 // pred_fallthru
          _
        // Predicated region
        $region81: #{tpu_custom_call.1} parent=63 // pred_check
          %p1706 = pneg %p318
        $region82: #{tpu_custom_call.1} parent=63 // pred_check_branch
          %1708 = sbr.rel (%p1706) target = $region84
        $region83: #{tpu_custom_call.1} parent=63 // pred_region
          _
        $region84: #{tpu_custom_call.1} parent=63 // pred_fallthru
          _
        // Predicated region
        $region85: #{tpu_custom_call.1} parent=63 // pred_check
          %p1709 = pneg %p344
        $region86: #{tpu_custom_call.1} parent=63 // pred_check_branch
          %1711 = sbr.rel (%p1709) target = $region88
        $region87: #{tpu_custom_call.1} parent=63 // pred_region
          %s1713 = ssub.s32 256, 256
          %1714 = vsyncadd %s1686, %s1713
          %s1715 = smul.addr %s33, 2
          %s1716 = smul.addr %s1715, 128
          %s1717 = scalar_lea.hbm %s13, %s1716
          %s1718 = sshll.u32 %s1689, 4
          %s1719 = int_to_ptr.vmem [resolvable:$true] %s1718
          %1724 = dma.vmem_to_hbm [thread:$0]  %s1719, 256, %s1717, %s1686, 128, 128, 8
        $region88: #{tpu_custom_call.1} parent=63 // pred_fallthru
          _
      $region64: #{tpu_custom_call.1} parent=5 // pred_fallthru
        _
      %p1725 = scmp.le.s32.totalorder 2, %s28
      // Predicated region
      $region89: #{tpu_custom_call.1} parent=5 // pred_check
        %p1726 = pneg %p1725
      $region90: #{tpu_custom_call.1} parent=5 // pred_check_branch
        %1728 = sbr.rel (%p1726) target = $region92
      $region91: #{tpu_custom_call.1} parent=5 // pred_region
        %s1729 = ssub.s32 %s28, 2
        // Predicated region
        $region93: #{tpu_custom_call.1} parent=91 // pred_check
          %p1730 = pneg %p298
        $region94: #{tpu_custom_call.1} parent=91 // pred_check_branch
          %1732 = sbr.rel (%p1730) target = $region96
        $region95: #{tpu_custom_call.1} parent=91 // pred_region
          %s1733 = sand.u32 %s283, 1
          %s1734 = scalar_lea.sflag [#allocation4], %s1733
          %s1735 = sand.u32 %s283, 1
          %s1736 = smul.addr %s1735, 16
          %s1737 = scalar_lea.vmem [#allocation8], %s1736
          %1738 = dma.done %s1734, 256
        $region96: #{tpu_custom_call.1} parent=91 // pred_fallthru
          _
        // Predicated region
        $region97: #{tpu_custom_call.1} parent=91 // pred_check
          %p1739 = pneg %p324
        $region98: #{tpu_custom_call.1} parent=91 // pred_check_branch
          %1741 = sbr.rel (%p1739) target = $region100
        $region99: #{tpu_custom_call.1} parent=91 // pred_region
          %p1742 = scmp.lt.s32.totalorder %s34, 1
          %s1743 = scalar_select %p1742, %s34, 1
          %s1744 = smul.addr %s1743, 2
          %s1745 = smul.addr %s1744, 8
          %s1746 = scalar_lea.vmem %s12, %s1745
        $region100: #{tpu_custom_call.1} parent=91 // pred_fallthru
          _
        // Predicated region
        $region101: #{tpu_custom_call.1} parent=91 // pred_check
          %p1747 = pneg %p350
        $region102: #{tpu_custom_call.1} parent=91 // pred_check_branch
          %1749 = sbr.rel (%p1747) target = $region104
        $region103: #{tpu_custom_call.1} parent=91 // pred_region
          %s1750 = sand.u32 %s335, 1
          %s1751 = scalar_lea.sflag [#allocation10], %s1750
          %s1752 = sand.u32 %s335, 1
          %s1753 = smul.addr %s1752, 16
          %s1754 = scalar_lea.vmem [#allocation9], %s1753
          %1755 = dma.done %s1751, 256
        $region104: #{tpu_custom_call.1} parent=91 // pred_fallthru
          _
      $region92: #{tpu_custom_call.1} parent=5 // pred_fallthru
        _
    $region6: #{tpu_custom_call.1} parent=1 // loop_footer
      %s32 = sadd.s32 1, %s28
    $region7: #{tpu_custom_call.1} parent=1 // loop_footer_branch
      %27 = sbr.rel target = $region3
    $region8: #{tpu_custom_call.1} parent=1 // loop_exit
      _
    %1756 = vsyncpa [#allocation3], 1
    %s1757 = scalar_lea.sflag [#allocation3], 1
    %1758 = vsyncpa %s1757, 1
    %1759 = vsyncpa [#allocation6], 1
    %1760 = vsyncpa [#allocation4], 1
    %s1761 = scalar_lea.sflag [#allocation4], 1
    %1762 = vsyncpa %s1761, 1
    %1763 = vsyncpa [#allocation10], 1
    %s1764 = scalar_lea.sflag [#allocation10], 1
    %1765 = vsyncpa %s1764, 1

</llo_original>
